<compile_context>
chip_gen: v7x
topology: tpu7x:2x2x1
jax: 0.10.0
libtpu: 0.0.40
codegen_flags: <defaults>
</compile_context>

<pallas_src>
import functools

import jax
import jax.numpy as jnp
from jax.experimental import pallas as pl
from jax.experimental.pallas import tpu as pltpu


def _fused_heads_kernel(head_channels, H, W, x_ref, w1_ref, b1_ref, w2t_ref,
                        b2_ref, o_ref):
    """One batch element, lane-dense (channels, H*W) layout.

      x_ref  : (Cin, H*W)          f32   channels on sublanes, pixels on lanes
      w1_ref : (9, sum_m, Cin)     bf16  tap-major fused 3x3 weights
      b1_ref : (sum_m, 1)          f32
      w2t_ref: (w2c_total, sum_m)  f32   block-diagonal fused 1x1 weights
      b2_ref : (w2c_total, 1)      f32
      o_ref  : (C_out_total, H*W)  f32
    """
    Cin, HW = x_ref.shape
    sum_m = w1_ref.shape[1]

    x32 = x_ref[...]                                         # (Cin, HW) f32

    # Boundary-validity masks (computed once; the tap loop below is unrolled).
    # Row masks need only the flat index; column masks need x = lane % W
    # (bit-and when W is a power of two -- avoids vector integer division).
    lane = jax.lax.broadcasted_iota(jnp.int32, (sum_m, HW), 1)
    xx = (lane & (W - 1)) if (W & (W - 1)) == 0 else lane % W
    row_ok = {-1: lane >= W, 0: None, 1: lane < (H - 1) * W}
    col_ok = {-1: xx >= 1, 0: None, 1: xx < W - 1}

    # 3x3 conv for all heads: nine accumulating K=Cin MXU dots on lane-rolled
    # views of x.  tap[p] = x[p + off] for valid positions; invalid (halo)
    # positions are zeroed AFTER the dot (mask is per-lane, so it commutes
    # with the channel reduction) on the smaller (sum_m, HW) result.
    acc = jnp.zeros((sum_m, HW), jnp.float32)
    taps = [(dy, dx) for dy in (-1, 0, 1) for dx in (-1, 0, 1)]
    for t, (dy, dx) in enumerate(taps):
        off = dy * W + dx
        xt = x32 if off == 0 else pltpu.roll(x32, shift=(-off) % HW, axis=1)
        r = jnp.dot(w1_ref[t], xt.astype(jnp.bfloat16),
                    preferred_element_type=jnp.float32)      # (sum_m, HW) f32
        mask = row_ok[dy]
        if col_ok[dx] is not None:
            mask = col_ok[dx] if mask is None else (mask & col_ok[dx])
        if mask is not None:
            r = jnp.where(mask, r, 0.0)
        acc = acc + r

    hidden = jnp.maximum(acc + b1_ref[...], 0.0)             # (sum_m, HW)

    # Fused (block-diagonal) 1x1 convs for all heads (tiny; kept in f32).
    pre = jnp.dot(w2t_ref[...], hidden,
                  preferred_element_type=jnp.float32) + b2_ref[...]

    # Epilogue: write each head straight into its output rows (no concat).
    # Stores are lane-dense (HW multiple of 128) -> unmasked vst.
    src = 0
    dst = 0
    for out_c in head_channels:
        if out_c == 2:                                       # CosineSineLayer
            theta = pre[src:src + 1, :]
            o_ref[dst:dst + 1, :] = jnp.cos(theta)
            o_ref[dst + 1:dst + 2, :] = jnp.sin(theta)
            src += 1
        else:
            o_ref[dst:dst + out_c, :] = pre[src:src + out_c, :]
            src += out_c
        dst += out_c


def fold_params(params, input_channels, head_channels):
    """Fold per-head weights into fused kernel operands.  Run ONCE per model."""
    del head_channels  # output structure is derived from the weight shapes
    Cin = input_channels
    w1s, b1s, w2s, b2s = zip(*params)
    m_sizes = [w1.shape[-1] for w1 in w1s]
    w2cs = [w2.shape[-1] for w2 in w2s]
    sum_m = sum(m_sizes)
    w2c_total = sum(w2cs)

    # (9, sum_m, Cin): tap-major (t = ky*3+kx), per-tap (m, Cin) blocks
    # concatenated over heads.  Pre-cast to bf16 for the MXU.
    w1_taps = jnp.concatenate(
        [w1.transpose(0, 1, 3, 2).reshape(9, mi, Cin)
         for w1, mi in zip(w1s, m_sizes)], axis=1).astype(jnp.bfloat16)
    b1 = jnp.concatenate(
        [b.reshape(mi, 1) for b, mi in zip(b1s, m_sizes)], axis=0)

    # Block-diagonal W2^T (w2c_total, sum_m): head i's 1x1 sees only its slice.
    w2t = jnp.zeros((w2c_total, sum_m), jnp.float32)
    ro = co = 0
    for w2, mi, ci in zip(w2s, m_sizes, w2cs):
        w2t = w2t.at[ro:ro + ci, co:co + mi].set(w2.T)
        ro += ci
        co += mi
    b2 = jnp.concatenate(
        [b.reshape(ci, 1) for b, ci in zip(b2s, w2cs)], axis=0)
    return w1_taps, b1, w2t, b2


def angle_distance_head(x_nchw, folded, *, head_channels):
    """Forward pass. x_nchw: (N, Cin, H, W). Returns (N, num_class, H, W)."""
    N, Cin, H, W = x_nchw.shape
    w1_taps, b1, w2t, b2 = folded
    sum_m = w1_taps.shape[1]
    w2c_total = w2t.shape[0]
    out_c_total = sum(head_channels)
    HW = H * W

    x_flat = x_nchw.reshape(N, Cin, HW)          # lane-dense view, free reshape

    kernel = functools.partial(_fused_heads_kernel, tuple(head_channels), H, W)
    out = pl.pallas_call(
        kernel,
        out_shape=jax.ShapeDtypeStruct((N, out_c_total, HW), jnp.float32),
        grid=(N,),
        in_specs=[
            pl.BlockSpec((None, Cin, HW), lambda n: (n, 0, 0)),
            pl.BlockSpec((9, sum_m, Cin), lambda n: (0, 0, 0)),
            pl.BlockSpec((sum_m, 1), lambda n: (0, 0)),
            pl.BlockSpec((w2c_total, sum_m), lambda n: (0, 0)),
            pl.BlockSpec((w2c_total, 1), lambda n: (0, 0)),
        ],
        out_specs=pl.BlockSpec((None, out_c_total, HW), lambda n: (n, 0, 0)),
        compiler_params=pltpu.CompilerParams(
            dimension_semantics=("parallel",),
            vmem_limit_bytes=32 * 1024 * 1024),
    )(x_flat, w1_taps, b1, w2t, b2)
    return out.reshape(N, out_c_total, H, W)     # NCHW (free reshape)


def make_params(key, input_channels, head_channels):
    """Deterministic synthetic parameters (matching nn.Module shapes, HWIO)."""
    m = input_channels // 4
    params = []
    for i, out_c in enumerate(head_channels):
        k1, k2, k3, k4 = jax.random.split(jax.random.fold_in(key, i), 4)
        w2c = 1 if out_c == 2 else out_c     # CosineSineLayer: Conv2d(m, 1, 1)
        w1 = 0.1 * jax.random.normal(k1, (3, 3, input_channels, m), jnp.float32)
        b1 = 0.1 * jax.random.normal(k2, (1, m), jnp.float32)
        w2 = 0.1 * jax.random.normal(k3, (m, w2c), jnp.float32)
        b2 = 0.1 * jax.random.normal(k4, (1, w2c), jnp.float32)
        params.append((w1, b1, w2, b2))
    return params


def reference(x_nchw, params, head_channels):
    """Pure-JAX f32 reference mirroring the PyTorch forward."""
    outs = []
    for (w1, b1, w2, b2), out_c in zip(params, head_channels):
        h = jax.lax.conv_general_dilated(
            x_nchw, w1, (1, 1), 'SAME',
            dimension_numbers=('NCHW', 'HWIO', 'NCHW'))
        h = jnp.maximum(h + b1.reshape(1, -1, 1, 1), 0.0)
        o = jax.lax.conv_general_dilated(
            h, w2.reshape(1, 1, *w2.shape), (1, 1), 'SAME',
            dimension_numbers=('NCHW', 'HWIO', 'NCHW'))
        o = o + b2.reshape(1, -1, 1, 1)
        if out_c == 2:
            o = jnp.concatenate([jnp.cos(o), jnp.sin(o)], axis=1)
        outs.append(o)
    return jnp.concatenate(outs, axis=1)


if __name__ == "__main__":
    key = jax.random.PRNGKey(0)

    # Module config: head_size = [[3], [1], [2]] -> num_class = 6
    N, Cin, H, W = 2, 8, 16, 16
    head_size = [[3], [1], [2]]
    head_channels = [c for hs in head_size for c in hs]   # sum(head_size, [])
    num_class = sum(head_channels)
    assert num_class == 6

    kx, kp = jax.random.split(key)
    x = jax.random.normal(kx, (N, Cin, H, W), jnp.float32)
    params = make_params(kp, Cin, head_channels)

    folded = fold_params(params, Cin, head_channels)       # hoisted: runs once
    fwd = jax.jit(functools.partial(angle_distance_head,
                                    head_channels=tuple(head_channels)))

    out = jax.block_until_ready(fwd(x, folded))
    assert out.shape == (N, num_class, H, W), out.shape

    ref = jax.block_until_ready(reference(x, params, head_channels))
    # bf16 MXU inputs for the 3x3 conv -> compare against the f32 reference
    # with a correspondingly loose tolerance.
    assert jnp.allclose(out, ref, atol=2e-2, rtol=2e-2), \
        float(jnp.max(jnp.abs(out - ref)))

    print("KERNEL_OK")
</pallas_src>

<mosaic_0001>
module attributes {stable_mosaic.version = 11 : i64} {
  func.func @_fused_heads_kernel(%arg0: i32, %arg1: memref<1x8x256xf32, #tpu.memory_space<vmem>>, %arg2: memref<9x6x8xbf16, #tpu.memory_space<vmem>>, %arg3: memref<6x1xf32, #tpu.memory_space<vmem>>, %arg4: memref<5x6xf32, #tpu.memory_space<vmem>>, %arg5: memref<5x1xf32, #tpu.memory_space<vmem>>, %arg6: memref<1x6x256xf32, #tpu.memory_space<vmem>>) attributes {dimension_semantics = [#tpu.dimension_semantics<parallel>], iteration_bounds = array<i64: 2>, scalar_prefetch = 0 : i64, scratch_operands = 0 : i64, tpu.core_type = #tpu.core_type<tc>, window_params = [{transform_indices = @transform_0, window_bounds = array<i64: 1, 8, 256>}, {pipeline_mode = #tpu.pipeline_mode<synchronous>, transform_indices = @transform_1, window_bounds = array<i64: 9, 6, 8>}, {pipeline_mode = #tpu.pipeline_mode<synchronous>, transform_indices = @transform_2, window_bounds = array<i64: 6, 1>}, {pipeline_mode = #tpu.pipeline_mode<synchronous>, transform_indices = @transform_3, window_bounds = array<i64: 5, 6>}, {pipeline_mode = #tpu.pipeline_mode<synchronous>, transform_indices = @transform_4, window_bounds = array<i64: 5, 1>}, {transform_indices = @transform_5, window_bounds = array<i64: 1, 6, 256>}]} {
    %c0 = arith.constant 0 : index
    %c0_0 = arith.constant 0 : index
    %c0_1 = arith.constant 0 : index
    %0 = vector.load %arg1[%c0, %c0_0, %c0_1] : memref<1x8x256xf32, #tpu.memory_space<vmem>>, vector<1x8x256xf32>
    %1 = vector.shape_cast %0 : vector<1x8x256xf32> to vector<8x256xf32>
    %2 = tpu.iota {dimensions = array<i32: 1>} : vector<6x256xi32>
    %c15_i32 = arith.constant 15 : i32
    %3 = vector.broadcast %c15_i32 : i32 to vector<6x256xi32>
    %4 = arith.andi %2, %3 : vector<6x256xi32>
    %c16_i32 = arith.constant 16 : i32
    %5 = vector.broadcast %c16_i32 : i32 to vector<6x256xi32>
    %6 = arith.cmpi sge, %2, %5 : vector<6x256xi32>
    %c240_i32 = arith.constant 240 : i32
    %7 = vector.broadcast %c240_i32 : i32 to vector<6x256xi32>
    %8 = arith.cmpi slt, %2, %7 : vector<6x256xi32>
    %c1_i32 = arith.constant 1 : i32
    %9 = vector.broadcast %c1_i32 : i32 to vector<6x256xi32>
    %10 = arith.cmpi sge, %4, %9 : vector<6x256xi32>
    %c15_i32_2 = arith.constant 15 : i32
    %11 = vector.broadcast %c15_i32_2 : i32 to vector<6x256xi32>
    %12 = arith.cmpi slt, %4, %11 : vector<6x256xi32>
    %cst = arith.constant 0.000000e+00 : f32
    %13 = vector.broadcast %cst : f32 to vector<6x256xf32>
    %c17_i32 = arith.constant 17 : i32
    %14 = tpu.dynamic_rotate %1 by %c17_i32 dim 1 : vector<8x256xf32>, i32 -> vector<8x256xf32>
    %c0_3 = arith.constant 0 : index
    %c0_4 = arith.constant 0 : index
    %c0_5 = arith.constant 0 : index
    %15 = vector.load %arg2[%c0_3, %c0_4, %c0_5] : memref<9x6x8xbf16, #tpu.memory_space<vmem>>, vector<1x6x8xbf16>
    %16 = vector.shape_cast %15 : vector<1x6x8xbf16> to vector<6x8xbf16>
    %17 = arith.truncf %14 : vector<8x256xf32> to vector<8x256xbf16>
    %cst_6 = arith.constant dense<0.000000e+00> : vector<6x256xf32>
    %18 = tpu.matmul %16, %17, %cst_6 {dimension_numbers = #tpu.dot_dimension_numbers<[1], [0], [0], [1], [0, 0, 1, 1], [], []>} : vector<6x8xbf16>, vector<8x256xbf16>, vector<6x256xf32> -> vector<6x256xf32>
    %19 = arith.andi %6, %10 : vector<6x256xi1>
    %cst_7 = arith.constant 0.000000e+00 : f32
    %20 = vector.broadcast %cst_7 : f32 to vector<6x256xf32>
    %21 = arith.select %19, %18, %20 : vector<6x256xi1>, vector<6x256xf32>
    %22 = arith.addf %13, %21 : vector<6x256xf32>
    %c16_i32_8 = arith.constant 16 : i32
    %23 = tpu.dynamic_rotate %1 by %c16_i32_8 dim 1 : vector<8x256xf32>, i32 -> vector<8x256xf32>
    %c1 = arith.constant 1 : index
    %c0_9 = arith.constant 0 : index
    %c0_10 = arith.constant 0 : index
    %24 = vector.load %arg2[%c1, %c0_9, %c0_10] : memref<9x6x8xbf16, #tpu.memory_space<vmem>>, vector<1x6x8xbf16>
    %25 = vector.shape_cast %24 : vector<1x6x8xbf16> to vector<6x8xbf16>
    %26 = arith.truncf %23 : vector<8x256xf32> to vector<8x256xbf16>
    %cst_11 = arith.constant dense<0.000000e+00> : vector<6x256xf32>
    %27 = tpu.matmul %25, %26, %cst_11 {dimension_numbers = #tpu.dot_dimension_numbers<[1], [0], [0], [1], [0, 0, 1, 1], [], []>} : vector<6x8xbf16>, vector<8x256xbf16>, vector<6x256xf32> -> vector<6x256xf32>
    %cst_12 = arith.constant 0.000000e+00 : f32
    %28 = vector.broadcast %cst_12 : f32 to vector<6x256xf32>
    %29 = arith.select %6, %27, %28 : vector<6x256xi1>, vector<6x256xf32>
    %30 = arith.addf %22, %29 : vector<6x256xf32>
    %c15_i32_13 = arith.constant 15 : i32
    %31 = tpu.dynamic_rotate %1 by %c15_i32_13 dim 1 : vector<8x256xf32>, i32 -> vector<8x256xf32>
    %c2 = arith.constant 2 : index
    %c0_14 = arith.constant 0 : index
    %c0_15 = arith.constant 0 : index
    %32 = vector.load %arg2[%c2, %c0_14, %c0_15] : memref<9x6x8xbf16, #tpu.memory_space<vmem>>, vector<1x6x8xbf16>
    %33 = vector.shape_cast %32 : vector<1x6x8xbf16> to vector<6x8xbf16>
    %34 = arith.truncf %31 : vector<8x256xf32> to vector<8x256xbf16>
    %cst_16 = arith.constant dense<0.000000e+00> : vector<6x256xf32>
    %35 = tpu.matmul %33, %34, %cst_16 {dimension_numbers = #tpu.dot_dimension_numbers<[1], [0], [0], [1], [0, 0, 1, 1], [], []>} : vector<6x8xbf16>, vector<8x256xbf16>, vector<6x256xf32> -> vector<6x256xf32>
    %36 = arith.andi %6, %12 : vector<6x256xi1>
    %cst_17 = arith.constant 0.000000e+00 : f32
    %37 = vector.broadcast %cst_17 : f32 to vector<6x256xf32>
    %38 = arith.select %36, %35, %37 : vector<6x256xi1>, vector<6x256xf32>
    %39 = arith.addf %30, %38 : vector<6x256xf32>
    %c1_i32_18 = arith.constant 1 : i32
    %40 = tpu.dynamic_rotate %1 by %c1_i32_18 dim 1 : vector<8x256xf32>, i32 -> vector<8x256xf32>
    %c3 = arith.constant 3 : index
    %c0_19 = arith.constant 0 : index
    %c0_20 = arith.constant 0 : index
    %41 = vector.load %arg2[%c3, %c0_19, %c0_20] : memref<9x6x8xbf16, #tpu.memory_space<vmem>>, vector<1x6x8xbf16>
    %42 = vector.shape_cast %41 : vector<1x6x8xbf16> to vector<6x8xbf16>
    %43 = arith.truncf %40 : vector<8x256xf32> to vector<8x256xbf16>
    %cst_21 = arith.constant dense<0.000000e+00> : vector<6x256xf32>
    %44 = tpu.matmul %42, %43, %cst_21 {dimension_numbers = #tpu.dot_dimension_numbers<[1], [0], [0], [1], [0, 0, 1, 1], [], []>} : vector<6x8xbf16>, vector<8x256xbf16>, vector<6x256xf32> -> vector<6x256xf32>
    %cst_22 = arith.constant 0.000000e+00 : f32
    %45 = vector.broadcast %cst_22 : f32 to vector<6x256xf32>
    %46 = arith.select %10, %44, %45 : vector<6x256xi1>, vector<6x256xf32>
    %47 = arith.addf %39, %46 : vector<6x256xf32>
    %c4 = arith.constant 4 : index
    %c0_23 = arith.constant 0 : index
    %c0_24 = arith.constant 0 : index
    %48 = vector.load %arg2[%c4, %c0_23, %c0_24] : memref<9x6x8xbf16, #tpu.memory_space<vmem>>, vector<1x6x8xbf16>
    %49 = vector.shape_cast %48 : vector<1x6x8xbf16> to vector<6x8xbf16>
    %50 = arith.truncf %1 : vector<8x256xf32> to vector<8x256xbf16>
    %cst_25 = arith.constant dense<0.000000e+00> : vector<6x256xf32>
    %51 = tpu.matmul %49, %50, %cst_25 {dimension_numbers = #tpu.dot_dimension_numbers<[1], [0], [0], [1], [0, 0, 1, 1], [], []>} : vector<6x8xbf16>, vector<8x256xbf16>, vector<6x256xf32> -> vector<6x256xf32>
    %52 = arith.addf %47, %51 : vector<6x256xf32>
    %c255_i32 = arith.constant 255 : i32
    %53 = tpu.dynamic_rotate %1 by %c255_i32 dim 1 : vector<8x256xf32>, i32 -> vector<8x256xf32>
    %c5 = arith.constant 5 : index
    %c0_26 = arith.constant 0 : index
    %c0_27 = arith.constant 0 : index
    %54 = vector.load %arg2[%c5, %c0_26, %c0_27] : memref<9x6x8xbf16, #tpu.memory_space<vmem>>, vector<1x6x8xbf16>
    %55 = vector.shape_cast %54 : vector<1x6x8xbf16> to vector<6x8xbf16>
    %56 = arith.truncf %53 : vector<8x256xf32> to vector<8x256xbf16>
    %cst_28 = arith.constant dense<0.000000e+00> : vector<6x256xf32>
    %57 = tpu.matmul %55, %56, %cst_28 {dimension_numbers = #tpu.dot_dimension_numbers<[1], [0], [0], [1], [0, 0, 1, 1], [], []>} : vector<6x8xbf16>, vector<8x256xbf16>, vector<6x256xf32> -> vector<6x256xf32>
    %cst_29 = arith.constant 0.000000e+00 : f32
    %58 = vector.broadcast %cst_29 : f32 to vector<6x256xf32>
    %59 = arith.select %12, %57, %58 : vector<6x256xi1>, vector<6x256xf32>
    %60 = arith.addf %52, %59 : vector<6x256xf32>
    %c241_i32 = arith.constant 241 : i32
    %61 = tpu.dynamic_rotate %1 by %c241_i32 dim 1 : vector<8x256xf32>, i32 -> vector<8x256xf32>
    %c6 = arith.constant 6 : index
    %c0_30 = arith.constant 0 : index
    %c0_31 = arith.constant 0 : index
    %62 = vector.load %arg2[%c6, %c0_30, %c0_31] : memref<9x6x8xbf16, #tpu.memory_space<vmem>>, vector<1x6x8xbf16>
    %63 = vector.shape_cast %62 : vector<1x6x8xbf16> to vector<6x8xbf16>
    %64 = arith.truncf %61 : vector<8x256xf32> to vector<8x256xbf16>
    %cst_32 = arith.constant dense<0.000000e+00> : vector<6x256xf32>
    %65 = tpu.matmul %63, %64, %cst_32 {dimension_numbers = #tpu.dot_dimension_numbers<[1], [0], [0], [1], [0, 0, 1, 1], [], []>} : vector<6x8xbf16>, vector<8x256xbf16>, vector<6x256xf32> -> vector<6x256xf32>
    %66 = arith.andi %8, %10 : vector<6x256xi1>
    %cst_33 = arith.constant 0.000000e+00 : f32
    %67 = vector.broadcast %cst_33 : f32 to vector<6x256xf32>
    %68 = arith.select %66, %65, %67 : vector<6x256xi1>, vector<6x256xf32>
    %69 = arith.addf %60, %68 : vector<6x256xf32>
    %c240_i32_34 = arith.constant 240 : i32
    %70 = tpu.dynamic_rotate %1 by %c240_i32_34 dim 1 : vector<8x256xf32>, i32 -> vector<8x256xf32>
    %c7 = arith.constant 7 : index
    %c0_35 = arith.constant 0 : index
    %c0_36 = arith.constant 0 : index
    %71 = vector.load %arg2[%c7, %c0_35, %c0_36] : memref<9x6x8xbf16, #tpu.memory_space<vmem>>, vector<1x6x8xbf16>
    %72 = vector.shape_cast %71 : vector<1x6x8xbf16> to vector<6x8xbf16>
    %73 = arith.truncf %70 : vector<8x256xf32> to vector<8x256xbf16>
    %cst_37 = arith.constant dense<0.000000e+00> : vector<6x256xf32>
    %74 = tpu.matmul %72, %73, %cst_37 {dimension_numbers = #tpu.dot_dimension_numbers<[1], [0], [0], [1], [0, 0, 1, 1], [], []>} : vector<6x8xbf16>, vector<8x256xbf16>, vector<6x256xf32> -> vector<6x256xf32>
    %cst_38 = arith.constant 0.000000e+00 : f32
    %75 = vector.broadcast %cst_38 : f32 to vector<6x256xf32>
    %76 = arith.select %8, %74, %75 : vector<6x256xi1>, vector<6x256xf32>
    %77 = arith.addf %69, %76 : vector<6x256xf32>
    %c239_i32 = arith.constant 239 : i32
    %78 = tpu.dynamic_rotate %1 by %c239_i32 dim 1 : vector<8x256xf32>, i32 -> vector<8x256xf32>
    %c8 = arith.constant 8 : index
    %c0_39 = arith.constant 0 : index
    %c0_40 = arith.constant 0 : index
    %79 = vector.load %arg2[%c8, %c0_39, %c0_40] : memref<9x6x8xbf16, #tpu.memory_space<vmem>>, vector<1x6x8xbf16>
    %80 = vector.shape_cast %79 : vector<1x6x8xbf16> to vector<6x8xbf16>
    %81 = arith.truncf %78 : vector<8x256xf32> to vector<8x256xbf16>
    %cst_41 = arith.constant dense<0.000000e+00> : vector<6x256xf32>
    %82 = tpu.matmul %80, %81, %cst_41 {dimension_numbers = #tpu.dot_dimension_numbers<[1], [0], [0], [1], [0, 0, 1, 1], [], []>} : vector<6x8xbf16>, vector<8x256xbf16>, vector<6x256xf32> -> vector<6x256xf32>
    %83 = arith.andi %8, %12 : vector<6x256xi1>
    %cst_42 = arith.constant 0.000000e+00 : f32
    %84 = vector.broadcast %cst_42 : f32 to vector<6x256xf32>
    %85 = arith.select %83, %82, %84 : vector<6x256xi1>, vector<6x256xf32>
    %86 = arith.addf %77, %85 : vector<6x256xf32>
    %c0_43 = arith.constant 0 : index
    %c0_44 = arith.constant 0 : index
    %87 = vector.load %arg3[%c0_43, %c0_44] : memref<6x1xf32, #tpu.memory_space<vmem>>, vector<6x1xf32>
    %88 = vector.broadcast %87 : vector<6x1xf32> to vector<6x256xf32>
    %89 = arith.addf %86, %88 : vector<6x256xf32>
    %cst_45 = arith.constant 0.000000e+00 : f32
    %90 = vector.broadcast %cst_45 : f32 to vector<6x256xf32>
    %91 = arith.maximumf %89, %90 : vector<6x256xf32>
    %c0_46 = arith.constant 0 : index
    %c0_47 = arith.constant 0 : index
    %92 = vector.load %arg4[%c0_46, %c0_47] : memref<5x6xf32, #tpu.memory_space<vmem>>, vector<5x6xf32>
    %cst_48 = arith.constant dense<0.000000e+00> : vector<5x256xf32>
    %93 = tpu.matmul %92, %91, %cst_48 {dimension_numbers = #tpu.dot_dimension_numbers<[1], [0], [0], [1], [0, 0, 1, 1], [], []>} : vector<5x6xf32>, vector<6x256xf32>, vector<5x256xf32> -> vector<5x256xf32>
    %c0_49 = arith.constant 0 : index
    %c0_50 = arith.constant 0 : index
    %94 = vector.load %arg5[%c0_49, %c0_50] : memref<5x1xf32, #tpu.memory_space<vmem>>, vector<5x1xf32>
    %95 = vector.broadcast %94 : vector<5x1xf32> to vector<5x256xf32>
    %96 = arith.addf %93, %95 : vector<5x256xf32>
    %97 = vector.extract_strided_slice %96 {offsets = [0, 0], sizes = [3, 256], strides = [1, 1]} : vector<5x256xf32> to vector<3x256xf32>
    %c0_51 = arith.constant 0 : index
    %c0_52 = arith.constant 0 : index
    %c0_53 = arith.constant 0 : index
    %98 = vector.load %arg6[%c0_51, %c0_52, %c0_53] : memref<1x6x256xf32, #tpu.memory_space<vmem>>, vector<1x3x256xf32>
    %99 = vector.shape_cast %98 : vector<1x3x256xf32> to vector<3x256xf32>
    %100 = vector.shape_cast %97 : vector<3x256xf32> to vector<1x3x256xf32>
    tpu.vector_store %arg6[%c0_51, %c0_52, %c0_53], %100 {strides = array<i32>} : memref<1x6x256xf32, #tpu.memory_space<vmem>>, vector<1x3x256xf32>,
    %101 = vector.extract_strided_slice %96 {offsets = [3, 0], sizes = [1, 256], strides = [1, 1]} : vector<5x256xf32> to vector<1x256xf32>
    %c0_54 = arith.constant 0 : index
    %c3_55 = arith.constant 3 : index
    %c0_56 = arith.constant 0 : index
    %102 = vector.load %arg6[%c0_54, %c3_55, %c0_56] : memref<1x6x256xf32, #tpu.memory_space<vmem>>, vector<1x1x256xf32>
    %103 = vector.shape_cast %102 : vector<1x1x256xf32> to vector<1x256xf32>
    %104 = vector.shape_cast %101 : vector<1x256xf32> to vector<1x1x256xf32>
    tpu.vector_store %arg6[%c0_54, %c3_55, %c0_56], %104 {strides = array<i32>} : memref<1x6x256xf32, #tpu.memory_space<vmem>>, vector<1x1x256xf32>,
    %105 = vector.extract_strided_slice %96 {offsets = [4, 0], sizes = [1, 256], strides = [1, 1]} : vector<5x256xf32> to vector<1x256xf32>
    %106 = math.cos %105 : vector<1x256xf32>
    %c0_57 = arith.constant 0 : index
    %c4_58 = arith.constant 4 : index
    %c0_59 = arith.constant 0 : index
    %107 = vector.load %arg6[%c0_57, %c4_58, %c0_59] : memref<1x6x256xf32, #tpu.memory_space<vmem>>, vector<1x1x256xf32>
    %108 = vector.shape_cast %107 : vector<1x1x256xf32> to vector<1x256xf32>
    %109 = vector.shape_cast %106 : vector<1x256xf32> to vector<1x1x256xf32>
    tpu.vector_store %arg6[%c0_57, %c4_58, %c0_59], %109 {strides = array<i32>} : memref<1x6x256xf32, #tpu.memory_space<vmem>>, vector<1x1x256xf32>,
    %110 = math.sin %105 : vector<1x256xf32>
    %c0_60 = arith.constant 0 : index
    %c5_61 = arith.constant 5 : index
    %c0_62 = arith.constant 0 : index
    %111 = vector.load %arg6[%c0_60, %c5_61, %c0_62] : memref<1x6x256xf32, #tpu.memory_space<vmem>>, vector<1x1x256xf32>
    %112 = vector.shape_cast %111 : vector<1x1x256xf32> to vector<1x256xf32>
    %113 = vector.shape_cast %110 : vector<1x256xf32> to vector<1x1x256xf32>
    tpu.vector_store %arg6[%c0_60, %c5_61, %c0_62], %113 {strides = array<i32>} : memref<1x6x256xf32, #tpu.memory_space<vmem>>, vector<1x1x256xf32>,
    return
  }
  func.func @transform_0(%arg0: i32) -> (i32, i32, i32) {
    %c0_i32 = arith.constant 0 : i32
    %c0_i32_0 = arith.constant 0 : i32
    %c0_i32_1 = arith.constant 0 : i32
    return %arg0, %c0_i32, %c0_i32_0 : i32, i32, i32
  }
  func.func @transform_1(%arg0: i32) -> (i32, i32, i32) {
    %c0_i32 = arith.constant 0 : i32
    %c0_i32_0 = arith.constant 0 : i32
    %c0_i32_1 = arith.constant 0 : i32
    %c0_i32_2 = arith.constant 0 : i32
    return %c0_i32, %c0_i32_0, %c0_i32_1 : i32, i32, i32
  }
  func.func @transform_2(%arg0: i32) -> (i32, i32) {
    %c0_i32 = arith.constant 0 : i32
    %c0_i32_0 = arith.constant 0 : i32
    %c0_i32_1 = arith.constant 0 : i32
    return %c0_i32, %c0_i32_0 : i32, i32
  }
  func.func @transform_3(%arg0: i32) -> (i32, i32) {
    %c0_i32 = arith.constant 0 : i32
    %c0_i32_0 = arith.constant 0 : i32
    %c0_i32_1 = arith.constant 0 : i32
    return %c0_i32, %c0_i32_0 : i32, i32
  }
  func.func @transform_4(%arg0: i32) -> (i32, i32) {
    %c0_i32 = arith.constant 0 : i32
    %c0_i32_0 = arith.constant 0 : i32
    %c0_i32_1 = arith.constant 0 : i32
    return %c0_i32, %c0_i32_0 : i32, i32
  }
  func.func @transform_5(%arg0: i32) -> (i32, i32, i32) {
    %c0_i32 = arith.constant 0 : i32
    %c0_i32_0 = arith.constant 0 : i32
    %c0_i32_1 = arith.constant 0 : i32
    return %arg0, %c0_i32, %c0_i32_0 : i32, i32, i32
  }
}

</mosaic_0001>

<llo_original>
// kernel: angle_distance_head.1
$region0: #{angle_distance_head.1}
  #allocation0 [shape = 'u32[]', space=smem, size = 0x4, offset = 0x4, fixed_abs, tag = 'smem constant byte address 0x4 - core index']
  #allocation1 [shape = 'u32[144,128]{1,0:T(1,128)}', space=vmem, size = 0x12000, scoped, tag = 'internal scratch']
  %s0 = inlined_call_operand.vmem [shape: f32[2,8,256], index: 0, kind: input, shape index: {}]
  %s1 = inlined_call_operand.vmem [shape: bf16[9,6,8], index: 1, kind: input, shape index: {}]
  %s2 = inlined_call_operand.vmem [shape: f32[6,1], index: 2, kind: input, shape index: {}]
  %s3 = inlined_call_operand.vmem [shape: f32[5,6], index: 3, kind: input, shape index: {}]
  %s4 = inlined_call_operand.vmem [shape: f32[5,1], index: 4, kind: input, shape index: {}]
  %s5 = inlined_call_operand.vmem [shape: f32[2,6,256], index: 5, kind: output, shape index: {}]
  %s6 = sld [smem:[#allocation0]]
  $region53: #{angle_distance_head.1} parent=0
    _
  %s8 = ssub.s32 1, %s6
  %s9 = scalar_select 0, %s8, %s6
  loop: start=0, step=1, limit=4
  $region2: #{angle_distance_head.1} parent=0 // loop_pre_header
    _
  $region3: #{angle_distance_head.1} parent=0 // loop_header
    %s11 = sphi 0, %s15
    %p12 = scmp.ge.s32.totalorder %s11, 4
    %s21 = sphi 0, %s23
    %s24 = sphi 0, %s21
    %s25 = sphi 0, %s24
    %s41 = sphi 0, %s25
    %s45 = sphi 0, %s45
    %s47 = sphi 0, %s45
    %s48 = sphi 0, %s47
    %s62 = sphi 0, %s48
    %s66 = sphi 0, %s66
    %s68 = sphi 0, %s66
    %s69 = sphi 0, %s68
    %s83 = sphi 0, %s69
    %s87 = sphi 0, %s87
    %s89 = sphi 0, %s87
    %s90 = sphi 0, %s89
    %s104 = sphi 0, %s90
    %s108 = sphi 0, %s108
    %s110 = sphi 0, %s108
    %s111 = sphi 0, %s110
    %s125 = sphi 0, %s111
    %s131 = sphi 0, %s133
    %s134 = sphi 0, %s131
    %s135 = sphi 0, %s134
    %s151 = sphi 0, %s135
  $region4: #{angle_distance_head.1} parent=0 // loop_header_branch
    %14 = sbr.rel (%p12) target = $region8
  $region5: #{angle_distance_head.1} parent=0 // loop_body
    %s16 = ssub.s32 %s11, 1
    %s17 = ssub.s32 %s11, 2
    %s18 = sadd.s32 %s11, 1
    %s19 = ssub.s32 %s11, %s18
    %p20 = scmp.eq.s32.totalorder %s19, 0
    %s22 = sadd.s32 %s21, 1
    %s23 = scalar_select %p20, %s21, %s22
    %p26 = pneg %p20
    %p27 = scmp.eq.s32.totalorder %s11, 1
    %p28 = por %p26, %p27
    %p29 = scmp.ne.s32.totalorder %s21, %s24
    %p30 = scmp.eq.s32.totalorder %s11, 0
    %p31 = por %p29, %p30
    %p32 = scmp.ne.s32.totalorder %s21, %s24
    %p33 = scmp.eq.s32.totalorder %s16, 1
    %p34 = por %p32, %p33
    %p35 = scmp.ne.s32.totalorder %s24, %s25
    %p36 = scmp.eq.s32.totalorder %s16, 0
    %p37 = por %p35, %p36
    %p38 = scmp.ne.s32.totalorder %s24, %s25
    %p39 = scmp.eq.s32.totalorder %s17, 1
    %p40 = por %p38, %p39
    %p42 = scmp.ne.s32.totalorder %s25, %s41
    %p43 = scmp.eq.s32.totalorder %s17, 0
    %p44 = por %p42, %p43
    %s46 = sadd.s32 %s45, 1
    %p49 = scmp.eq.s32.totalorder %s11, 1
    %p50 = scmp.ne.s32.totalorder %s45, %s47
    %p51 = scmp.eq.s32.totalorder %s11, 0
    %p52 = por %p50, %p51
    %p53 = scmp.ne.s32.totalorder %s45, %s47
    %p54 = scmp.eq.s32.totalorder %s16, 1
    %p55 = por %p53, %p54
    %p56 = scmp.ne.s32.totalorder %s47, %s48
    %p57 = scmp.eq.s32.totalorder %s16, 0
    %p58 = por %p56, %p57
    %p59 = scmp.ne.s32.totalorder %s47, %s48
    %p60 = scmp.eq.s32.totalorder %s17, 1
    %p61 = por %p59, %p60
    %p63 = scmp.ne.s32.totalorder %s48, %s62
    %p64 = scmp.eq.s32.totalorder %s17, 0
    %p65 = por %p63, %p64
    %s67 = sadd.s32 %s66, 1
    %p70 = scmp.eq.s32.totalorder %s11, 1
    %p71 = scmp.ne.s32.totalorder %s66, %s68
    %p72 = scmp.eq.s32.totalorder %s11, 0
    %p73 = por %p71, %p72
    %p74 = scmp.ne.s32.totalorder %s66, %s68
    %p75 = scmp.eq.s32.totalorder %s16, 1
    %p76 = por %p74, %p75
    %p77 = scmp.ne.s32.totalorder %s68, %s69
    %p78 = scmp.eq.s32.totalorder %s16, 0
    %p79 = por %p77, %p78
    %p80 = scmp.ne.s32.totalorder %s68, %s69
    %p81 = scmp.eq.s32.totalorder %s17, 1
    %p82 = por %p80, %p81
    %p84 = scmp.ne.s32.totalorder %s69, %s83
    %p85 = scmp.eq.s32.totalorder %s17, 0
    %p86 = por %p84, %p85
    %s88 = sadd.s32 %s87, 1
    %p91 = scmp.eq.s32.totalorder %s11, 1
    %p92 = scmp.ne.s32.totalorder %s87, %s89
    %p93 = scmp.eq.s32.totalorder %s11, 0
    %p94 = por %p92, %p93
    %p95 = scmp.ne.s32.totalorder %s87, %s89
    %p96 = scmp.eq.s32.totalorder %s16, 1
    %p97 = por %p95, %p96
    %p98 = scmp.ne.s32.totalorder %s89, %s90
    %p99 = scmp.eq.s32.totalorder %s16, 0
    %p100 = por %p98, %p99
    %p101 = scmp.ne.s32.totalorder %s89, %s90
    %p102 = scmp.eq.s32.totalorder %s17, 1
    %p103 = por %p101, %p102
    %p105 = scmp.ne.s32.totalorder %s90, %s104
    %p106 = scmp.eq.s32.totalorder %s17, 0
    %p107 = por %p105, %p106
    %s109 = sadd.s32 %s108, 1
    %p112 = scmp.eq.s32.totalorder %s11, 1
    %p113 = scmp.ne.s32.totalorder %s108, %s110
    %p114 = scmp.eq.s32.totalorder %s11, 0
    %p115 = por %p113, %p114
    %p116 = scmp.ne.s32.totalorder %s108, %s110
    %p117 = scmp.eq.s32.totalorder %s16, 1
    %p118 = por %p116, %p117
    %p119 = scmp.ne.s32.totalorder %s110, %s111
    %p120 = scmp.eq.s32.totalorder %s16, 0
    %p121 = por %p119, %p120
    %p122 = scmp.ne.s32.totalorder %s110, %s111
    %p123 = scmp.eq.s32.totalorder %s17, 1
    %p124 = por %p122, %p123
    %p126 = scmp.ne.s32.totalorder %s111, %s125
    %p127 = scmp.eq.s32.totalorder %s17, 0
    %p128 = por %p126, %p127
    %s129 = ssub.s32 %s11, %s18
    %p130 = scmp.eq.s32.totalorder %s129, 0
    %s132 = sadd.s32 %s131, 1
    %s133 = scalar_select %p130, %s131, %s132
    %p136 = pneg %p130
    %p137 = scmp.eq.s32.totalorder %s11, 1
    %p138 = por %p136, %p137
    %p139 = scmp.ne.s32.totalorder %s131, %s134
    %p140 = scmp.eq.s32.totalorder %s11, 0
    %p141 = por %p139, %p140
    %p142 = scmp.ne.s32.totalorder %s131, %s134
    %p143 = scmp.eq.s32.totalorder %s16, 1
    %p144 = por %p142, %p143
    %p145 = scmp.ne.s32.totalorder %s134, %s135
    %p146 = scmp.eq.s32.totalorder %s16, 0
    %p147 = por %p145, %p146
    %p148 = scmp.ne.s32.totalorder %s134, %s135
    %p149 = scmp.eq.s32.totalorder %s17, 1
    %p150 = por %p148, %p149
    %p152 = scmp.ne.s32.totalorder %s135, %s151
    %p153 = scmp.eq.s32.totalorder %s17, 0
    %p154 = por %p152, %p153
    %p155 = scmp.le.s32.totalorder 1, %s11
    %p156 = scmp.lt.s32.totalorder %s11, 3
    %p157 = pnand %p155, %p156
    %p158 = pneg %p157
    // Predicated region
    $region9: #{angle_distance_head.1} parent=5 // pred_check
      _
    $region10: #{angle_distance_head.1} parent=5 // pred_check_branch
      %160 = sbr.rel (%p157) target = $region12
    $region11: #{angle_distance_head.1} parent=5 // pred_region
      %s161 = ssub.s32 %s11, 1
      // Predicated region
      $region13: #{angle_distance_head.1} parent=11 // pred_check
        %p162 = pneg %p58
      $region14: #{angle_distance_head.1} parent=11 // pred_check_branch
        %164 = sbr.rel (%p162) target = $region16
      $region15: #{angle_distance_head.1} parent=11 // pred_region
        _
      $region16: #{angle_distance_head.1} parent=11 // pred_fallthru
        _
      // Predicated region
      $region17: #{angle_distance_head.1} parent=11 // pred_check
        %p165 = pneg %p79
      $region18: #{angle_distance_head.1} parent=11 // pred_check_branch
        %167 = sbr.rel (%p165) target = $region20
      $region19: #{angle_distance_head.1} parent=11 // pred_region
        _
      $region20: #{angle_distance_head.1} parent=11 // pred_fallthru
        _
      // Predicated region
      $region21: #{angle_distance_head.1} parent=11 // pred_check
        %p168 = pneg %p100
      $region22: #{angle_distance_head.1} parent=11 // pred_check_branch
        %170 = sbr.rel (%p168) target = $region24
      $region23: #{angle_distance_head.1} parent=11 // pred_region
        _
      $region24: #{angle_distance_head.1} parent=11 // pred_fallthru
        _
      // Predicated region
      $region25: #{angle_distance_head.1} parent=11 // pred_check
        %p171 = pneg %p121
      $region26: #{angle_distance_head.1} parent=11 // pred_check_branch
        %173 = sbr.rel (%p171) target = $region28
      $region27: #{angle_distance_head.1} parent=11 // pred_region
        _
      $region28: #{angle_distance_head.1} parent=11 // pred_fallthru
        _
    $region12: #{angle_distance_head.1} parent=5 // pred_fallthru
      _
    %p174 = scmp.lt.s32.totalorder %s11, 2
    // Predicated region
    $region29: #{angle_distance_head.1} parent=5 // pred_check
      %p175 = pneg %p174
    $region30: #{angle_distance_head.1} parent=5 // pred_check_branch
      %177 = sbr.rel (%p175) target = $region32
    $region31: #{angle_distance_head.1} parent=5 // pred_region
      // Predicated region
      $region33: #{angle_distance_head.1} parent=31 // pred_check
        %p178 = pneg %p31
      $region34: #{angle_distance_head.1} parent=31 // pred_check_branch
        %180 = sbr.rel (%p178) target = $region36
      $region35: #{angle_distance_head.1} parent=31 // pred_region
        %p181 = scmp.lt.s32.totalorder %s11, 1
        %s182 = scalar_select %p181, %s11, 1
        %s183 = smul.addr %s182, 2
        %s184 = smul.addr %s183, 8
        %s185 = scalar_lea.vmem %s0, %s184
      $region36: #{angle_distance_head.1} parent=31 // pred_fallthru
        _
    $region32: #{angle_distance_head.1} parent=5 // pred_fallthru
      _
    %p186 = scmp.le.s32.totalorder 1, %s11
    %p187 = scmp.lt.s32.totalorder %s11, 3
    %p188 = pnand %p186, %p187
    %p189 = pneg %p188
    // Predicated region
    $region37: #{angle_distance_head.1} parent=5 // pred_check
      _
    $region38: #{angle_distance_head.1} parent=5 // pred_check_branch
      %191 = sbr.rel (%p188) target = $region40
    $region39: #{angle_distance_head.1} parent=5 // pred_region
      %s192 = ssub.s32 %s11, 1
      %p193 = scmp.lt.s32.totalorder %s16, 1
      %s194 = scalar_select %p193, %s16, 1
      %s195 = smul.addr %s194, 2
      %s196 = smul.addr %s195, 8
      %s197 = scalar_lea.vmem %s0, %s196
      %p198 = pneg %p37
      %p199 = pneg %p34
      %p200 = pneg %p58
      %p201 = pneg %p55
      %p202 = pneg %p79
      %p203 = pneg %p76
      %p204 = pneg %p100
      %p205 = pneg %p97
      %p206 = pneg %p121
      %p207 = pneg %p118
      %p208 = pneg %p147
      %p209 = pneg %p144
      %p210 = scmp.lt.s32.totalorder %s16, 1
      %s211 = scalar_select %p210, %s16, 1
      %s212 = smul.addr %s211, 2
      %s213 = smul.addr %s212, 8
      %s214 = scalar_lea.vmem %s5, %s213
      %p215 = scmp.lt.s32.totalorder %s16, 1
      %s216 = scalar_select %p215, %s16, 1
      %s217 = smul.addr %s216, 2
      %s218 = smul.addr %s217, 8
      %s219 = scalar_lea.vmem %s0, %s218
      %p220 = scmp.lt.s32.totalorder %s16, 1
      %s221 = scalar_select %p220, %s16, 1
      %s222 = smul.addr %s221, 2
      %s223 = smul.addr %s222, 8
      %s224 = scalar_lea.vmem %s5, %s223
      %v226 = vld [vmem:[%s219] sm:$0xff]
      %v227 = vld [vmem:[%s219 + $0x8] sm:$0xff]
      %v228 = vlaneseq
      %v229 = vand.u32 %v228, 127
      %v230 = vadd.s32 %v229, 128
      %v231 = vand.u32 %v229, 15
      %v232 = vand.u32 %v230, 15
      %vm233 = vcmp.ge.s32.totalorder %v229, 16
      %vm234 = vcmp.ge.s32.totalorder %v230, 16
      %vm235 = vcmp.lt.s32.totalorder %v229, 240
      %vm236 = vcmp.lt.s32.totalorder %v230, 240
      %vm237 = vcmp.ge.s32.totalorder %v231, 1
      %vm238 = vcmp.ge.s32.totalorder %v232, 1
      %vm239 = vcmp.lt.s32.totalorder %v231, 15
      %vm240 = vcmp.lt.s32.totalorder %v232, 15
      %241 = vrot.lane.b32.xlu0 %v226, 17
      %v242 = vpop.permute.xlu0 %241
      %243 = vrot.lane.b32.xlu0 %v227, 17
      %v244 = vpop.permute.xlu0 %243
      %vm245 = vcmp.lt.s32.totalorder %v229, 17
      %v246 = vsel %vm245, %v242, %v244
      %v247 = vsel %vm245, %v244, %v242
      %v248 = vld [vmem:[%s1] sm:$0x7]
      %v249 = vpack.c.bf16 %v247, %v247
      %v250 = vpack.c.bf16 %v246, %v246
      %vm251 = vcmask 64512
      %v253 = vsel %vm251, %v248, 0
      %vm255 = vcmask 1043456
      %v257 = vsel %vm255, %v249, 0
      %v260 = vsel %vm255, %v250, 0
      %262 = vmatprep.subr.bf16.mxu0 %v260
      %263 = vmatpush1.bf16.msra.mxu0 %v257
      %264 = vmatprep.subr.bf16.mxu0 0
      %265 = vmatpush1.bf16.msra.mxu0 0
      %266 = vmatprep.subr.bf16.mxu0 0
      %267 = vmatpush1.bf16.msra.mxu0 0
      %268 = vmatprep.subr.bf16.mxu0 0
      %269 = vmatpush1.bf16.msra.mxu0 0
      %270 = vmatprep.subr.bf16.mxu0 0
      %271 = vmatpush1.bf16.msra.mxu0 0
      %272 = vmatprep.subr.bf16.mxu0 0
      %273 = vmatpush1.bf16.msra.mxu0 0
      %274 = vmatprep.subr.bf16.mxu0 0
      %275 = vmatpush1.bf16.msra.mxu0 0
      %276 = vmatprep.subr.bf16.mxu0 0
      %277 = vmatpush1.bf16.msra.mxu0 0
      %278 = vmatprep.subr.bf16.mxu0 0
      %279 = vmatpush1.bf16.msra.mxu0 0
      %280 = vmatprep.subr.bf16.mxu0 0
      %281 = vmatpush1.bf16.msra.mxu0 0
      %282 = vmatprep.subr.bf16.mxu0 0
      %283 = vmatpush1.bf16.msra.mxu0 0
      %284 = vmatprep.subr.bf16.mxu0 0
      %285 = vmatpush1.bf16.msra.mxu0 0
      %286 = vmatprep.subr.bf16.mxu0 0
      %287 = vmatpush1.bf16.msra.mxu0 0
      %288 = vmatprep.subr.bf16.mxu0 0
      %289 = vmatpush1.bf16.msra.mxu0 0
      %290 = vmatprep.subr.bf16.mxu0 0
      %291 = vmatpush1.bf16.msra.mxu0 0
      %292 = vmatprep.subr.bf16.mxu0 0
      %293 = vmatpush1.bf16.msra.mxu0 0
      %294 = vmatprep.mubr.bf16.mxu0 0
      %295 = vmatmul.mubr.bf16.gmra.mrb[0].mxu0 %v253
      %v296 = vpop.f32.mrb[0].mxu0
      %v297 = vadd.f32 0.0, %v296
      %v298 = vpop.f32.mrb[0].mxu0
      %v299 = vadd.f32 0.0, %v298
      %v300 = vpop.f32.mrb[0].mxu0
      %v301 = vpop.f32.mrb[0].mxu0
      %302 = vdwg.mxu0
      %vm303 = vmand %vm233, %vm237
      %vm304 = vmand %vm234, %vm238
      %v305 = vsel %vm303, %v297, 0.0
      %v306 = vsel %vm304, %v299, 0.0
      %v307 = vadd.f32 %v305, 0.0
      %v308 = vadd.f32 %v306, 0.0
      %309 = vrot.lane.b32.xlu0 %v226, 16
      %v310 = vpop.permute.xlu0 %309
      %311 = vrot.lane.b32.xlu0 %v227, 16
      %v312 = vpop.permute.xlu0 %311
      %vm313 = vcmp.lt.s32.totalorder %v229, 16
      %v314 = vsel %vm313, %v310, %v312
      %v315 = vsel %vm313, %v312, %v310
      %s316 = scalar_lea.vmem %s1, 4
      %v317 = vld [vmem:[%s316] sm:$0x7]
      %v318 = vpack.c.bf16 %v315, %v315
      %v319 = vpack.c.bf16 %v314, %v314
      %v321 = vsel %vm251, %v317, 0
      %v324 = vsel %vm255, %v318, 0
      %v327 = vsel %vm255, %v319, 0
      %329 = vmatprep.subr.bf16.mxu0 %v327
      %330 = vmatpush1.bf16.msra.mxu0 %v324
      %331 = vmatprep.subr.bf16.mxu0 0
      %332 = vmatpush1.bf16.msra.mxu0 0
      %333 = vmatprep.subr.bf16.mxu0 0
      %334 = vmatpush1.bf16.msra.mxu0 0
      %335 = vmatprep.subr.bf16.mxu0 0
      %336 = vmatpush1.bf16.msra.mxu0 0
      %337 = vmatprep.subr.bf16.mxu0 0
      %338 = vmatpush1.bf16.msra.mxu0 0
      %339 = vmatprep.subr.bf16.mxu0 0
      %340 = vmatpush1.bf16.msra.mxu0 0
      %341 = vmatprep.subr.bf16.mxu0 0
      %342 = vmatpush1.bf16.msra.mxu0 0
      %343 = vmatprep.subr.bf16.mxu0 0
      %344 = vmatpush1.bf16.msra.mxu0 0
      %345 = vmatprep.subr.bf16.mxu0 0
      %346 = vmatpush1.bf16.msra.mxu0 0
      %347 = vmatprep.subr.bf16.mxu0 0
      %348 = vmatpush1.bf16.msra.mxu0 0
      %349 = vmatprep.subr.bf16.mxu0 0
      %350 = vmatpush1.bf16.msra.mxu0 0
      %351 = vmatprep.subr.bf16.mxu0 0
      %352 = vmatpush1.bf16.msra.mxu0 0
      %353 = vmatprep.subr.bf16.mxu0 0
      %354 = vmatpush1.bf16.msra.mxu0 0
      %355 = vmatprep.subr.bf16.mxu0 0
      %356 = vmatpush1.bf16.msra.mxu0 0
      %357 = vmatprep.subr.bf16.mxu0 0
      %358 = vmatpush1.bf16.msra.mxu0 0
      %359 = vmatprep.subr.bf16.mxu0 0
      %360 = vmatpush1.bf16.msra.mxu0 0
      %361 = vmatprep.mubr.bf16.mxu0 0
      %362 = vmatmul.mubr.bf16.gmra.mrb[0].mxu0 %v321
      %v363 = vpop.f32.mrb[0].mxu0
      %v364 = vadd.f32 0.0, %v363
      %v365 = vpop.f32.mrb[0].mxu0
      %v366 = vadd.f32 0.0, %v365
      %v367 = vpop.f32.mrb[0].mxu0
      %v368 = vpop.f32.mrb[0].mxu0
      %369 = vdwg.mxu0
      %v370 = vsel %vm233, %v364, 0.0
      %v371 = vsel %vm234, %v366, 0.0
      %v372 = vadd.f32 %v307, %v370
      %v373 = vadd.f32 %v308, %v371
      %374 = vrot.lane.b32.xlu0 %v226, 15
      %v375 = vpop.permute.xlu0 %374
      %376 = vrot.lane.b32.xlu0 %v227, 15
      %v377 = vpop.permute.xlu0 %376
      %vm378 = vcmp.lt.s32.totalorder %v229, 15
      %v379 = vsel %vm378, %v375, %v377
      %v380 = vsel %vm378, %v377, %v375
      %s381 = scalar_lea.vmem %s1, 8
      %v382 = vld [vmem:[%s381] sm:$0x7]
      %v383 = vpack.c.bf16 %v380, %v380
      %v384 = vpack.c.bf16 %v379, %v379
      %v386 = vsel %vm251, %v382, 0
      %v389 = vsel %vm255, %v383, 0
      %v392 = vsel %vm255, %v384, 0
      %394 = vmatprep.subr.bf16.mxu0 %v392
      %395 = vmatpush1.bf16.msra.mxu0 %v389
      %396 = vmatprep.subr.bf16.mxu0 0
      %397 = vmatpush1.bf16.msra.mxu0 0
      %398 = vmatprep.subr.bf16.mxu0 0
      %399 = vmatpush1.bf16.msra.mxu0 0
      %400 = vmatprep.subr.bf16.mxu0 0
      %401 = vmatpush1.bf16.msra.mxu0 0
      %402 = vmatprep.subr.bf16.mxu0 0
      %403 = vmatpush1.bf16.msra.mxu0 0
      %404 = vmatprep.subr.bf16.mxu0 0
      %405 = vmatpush1.bf16.msra.mxu0 0
      %406 = vmatprep.subr.bf16.mxu0 0
      %407 = vmatpush1.bf16.msra.mxu0 0
      %408 = vmatprep.subr.bf16.mxu0 0
      %409 = vmatpush1.bf16.msra.mxu0 0
      %410 = vmatprep.subr.bf16.mxu0 0
      %411 = vmatpush1.bf16.msra.mxu0 0
      %412 = vmatprep.subr.bf16.mxu0 0
      %413 = vmatpush1.bf16.msra.mxu0 0
      %414 = vmatprep.subr.bf16.mxu0 0
      %415 = vmatpush1.bf16.msra.mxu0 0
      %416 = vmatprep.subr.bf16.mxu0 0
      %417 = vmatpush1.bf16.msra.mxu0 0
      %418 = vmatprep.subr.bf16.mxu0 0
      %419 = vmatpush1.bf16.msra.mxu0 0
      %420 = vmatprep.subr.bf16.mxu0 0
      %421 = vmatpush1.bf16.msra.mxu0 0
      %422 = vmatprep.subr.bf16.mxu0 0
      %423 = vmatpush1.bf16.msra.mxu0 0
      %424 = vmatprep.subr.bf16.mxu0 0
      %425 = vmatpush1.bf16.msra.mxu0 0
      %426 = vmatprep.mubr.bf16.mxu0 0
      %427 = vmatmul.mubr.bf16.gmra.mrb[0].mxu0 %v386
      %v428 = vpop.f32.mrb[0].mxu0
      %v429 = vadd.f32 0.0, %v428
      %v430 = vpop.f32.mrb[0].mxu0
      %v431 = vadd.f32 0.0, %v430
      %v432 = vpop.f32.mrb[0].mxu0
      %v433 = vpop.f32.mrb[0].mxu0
      %434 = vdwg.mxu0
      %vm435 = vmand %vm233, %vm239
      %vm436 = vmand %vm234, %vm240
      %v437 = vsel %vm435, %v429, 0.0
      %v438 = vsel %vm436, %v431, 0.0
      %v439 = vadd.f32 %v372, %v437
      %v440 = vadd.f32 %v373, %v438
      %441 = vrot.lane.b32.xlu0 %v226, 1
      %v442 = vpop.permute.xlu0 %441
      %443 = vrot.lane.b32.xlu0 %v227, 1
      %v444 = vpop.permute.xlu0 %443
      %vm445 = vcmp.lt.s32.totalorder %v229, 1
      %v446 = vsel %vm445, %v442, %v444
      %v447 = vsel %vm445, %v444, %v442
      %s448 = scalar_lea.vmem %s1, 12
      %v449 = vld [vmem:[%s448] sm:$0x7]
      %v450 = vpack.c.bf16 %v447, %v447
      %v451 = vpack.c.bf16 %v446, %v446
      %v453 = vsel %vm251, %v449, 0
      %v456 = vsel %vm255, %v450, 0
      %v459 = vsel %vm255, %v451, 0
      %461 = vmatprep.subr.bf16.mxu0 %v459
      %462 = vmatpush1.bf16.msra.mxu0 %v456
      %463 = vmatprep.subr.bf16.mxu0 0
      %464 = vmatpush1.bf16.msra.mxu0 0
      %465 = vmatprep.subr.bf16.mxu0 0
      %466 = vmatpush1.bf16.msra.mxu0 0
      %467 = vmatprep.subr.bf16.mxu0 0
      %468 = vmatpush1.bf16.msra.mxu0 0
      %469 = vmatprep.subr.bf16.mxu0 0
      %470 = vmatpush1.bf16.msra.mxu0 0
      %471 = vmatprep.subr.bf16.mxu0 0
      %472 = vmatpush1.bf16.msra.mxu0 0
      %473 = vmatprep.subr.bf16.mxu0 0
      %474 = vmatpush1.bf16.msra.mxu0 0
      %475 = vmatprep.subr.bf16.mxu0 0
      %476 = vmatpush1.bf16.msra.mxu0 0
      %477 = vmatprep.subr.bf16.mxu0 0
      %478 = vmatpush1.bf16.msra.mxu0 0
      %479 = vmatprep.subr.bf16.mxu0 0
      %480 = vmatpush1.bf16.msra.mxu0 0
      %481 = vmatprep.subr.bf16.mxu0 0
      %482 = vmatpush1.bf16.msra.mxu0 0
      %483 = vmatprep.subr.bf16.mxu0 0
      %484 = vmatpush1.bf16.msra.mxu0 0
      %485 = vmatprep.subr.bf16.mxu0 0
      %486 = vmatpush1.bf16.msra.mxu0 0
      %487 = vmatprep.subr.bf16.mxu0 0
      %488 = vmatpush1.bf16.msra.mxu0 0
      %489 = vmatprep.subr.bf16.mxu0 0
      %490 = vmatpush1.bf16.msra.mxu0 0
      %491 = vmatprep.subr.bf16.mxu0 0
      %492 = vmatpush1.bf16.msra.mxu0 0
      %493 = vmatprep.mubr.bf16.mxu0 0
      %494 = vmatmul.mubr.bf16.gmra.mrb[0].mxu0 %v453
      %v495 = vpop.f32.mrb[0].mxu0
      %v496 = vadd.f32 0.0, %v495
      %v497 = vpop.f32.mrb[0].mxu0
      %v498 = vadd.f32 0.0, %v497
      %v499 = vpop.f32.mrb[0].mxu0
      %v500 = vpop.f32.mrb[0].mxu0
      %501 = vdwg.mxu0
      %v502 = vsel %vm237, %v496, 0.0
      %v503 = vsel %vm238, %v498, 0.0
      %v504 = vadd.f32 %v439, %v502
      %v505 = vadd.f32 %v440, %v503
      %s506 = scalar_lea.vmem %s1, 16
      %v507 = vld [vmem:[%s506] sm:$0x7]
      %v508 = vpack.c.bf16 %v226, %v226
      %v509 = vpack.c.bf16 %v227, %v227
      %v511 = vsel %vm251, %v507, 0
      %v514 = vsel %vm255, %v508, 0
      %v517 = vsel %vm255, %v509, 0
      %519 = vmatprep.subr.bf16.mxu0 %v517
      %520 = vmatpush1.bf16.msra.mxu0 %v514
      %521 = vmatprep.subr.bf16.mxu0 0
      %522 = vmatpush1.bf16.msra.mxu0 0
      %523 = vmatprep.subr.bf16.mxu0 0
      %524 = vmatpush1.bf16.msra.mxu0 0
      %525 = vmatprep.subr.bf16.mxu0 0
      %526 = vmatpush1.bf16.msra.mxu0 0
      %527 = vmatprep.subr.bf16.mxu0 0
      %528 = vmatpush1.bf16.msra.mxu0 0
      %529 = vmatprep.subr.bf16.mxu0 0
      %530 = vmatpush1.bf16.msra.mxu0 0
      %531 = vmatprep.subr.bf16.mxu0 0
      %532 = vmatpush1.bf16.msra.mxu0 0
      %533 = vmatprep.subr.bf16.mxu0 0
      %534 = vmatpush1.bf16.msra.mxu0 0
      %535 = vmatprep.subr.bf16.mxu0 0
      %536 = vmatpush1.bf16.msra.mxu0 0
      %537 = vmatprep.subr.bf16.mxu0 0
      %538 = vmatpush1.bf16.msra.mxu0 0
      %539 = vmatprep.subr.bf16.mxu0 0
      %540 = vmatpush1.bf16.msra.mxu0 0
      %541 = vmatprep.subr.bf16.mxu0 0
      %542 = vmatpush1.bf16.msra.mxu0 0
      %543 = vmatprep.subr.bf16.mxu0 0
      %544 = vmatpush1.bf16.msra.mxu0 0
      %545 = vmatprep.subr.bf16.mxu0 0
      %546 = vmatpush1.bf16.msra.mxu0 0
      %547 = vmatprep.subr.bf16.mxu0 0
      %548 = vmatpush1.bf16.msra.mxu0 0
      %549 = vmatprep.subr.bf16.mxu0 0
      %550 = vmatpush1.bf16.msra.mxu0 0
      %551 = vmatprep.mubr.bf16.mxu0 0
      %552 = vmatmul.mubr.bf16.gmra.mrb[0].mxu0 %v511
      %v553 = vpop.f32.mrb[0].mxu0
      %v554 = vadd.f32 0.0, %v553
      %v555 = vpop.f32.mrb[0].mxu0
      %v556 = vadd.f32 0.0, %v555
      %v557 = vpop.f32.mrb[0].mxu0
      %v558 = vpop.f32.mrb[0].mxu0
      %559 = vdwg.mxu0
      %v560 = vadd.f32 %v504, %v554
      %v561 = vadd.f32 %v505, %v556
      %562 = vrot.lane.b32.xlu0 %v226, 127
      %v563 = vpop.permute.xlu0 %562
      %564 = vrot.lane.b32.xlu0 %v227, 127
      %v565 = vpop.permute.xlu0 %564
      %vm566 = vcmp.lt.s32.totalorder %v229, 127
      %v567 = vsel %vm566, %v563, %v565
      %v568 = vsel %vm566, %v565, %v563
      %s569 = scalar_lea.vmem %s1, 20
      %v570 = vld [vmem:[%s569] sm:$0x7]
      %v571 = vpack.c.bf16 %v567, %v567
      %v572 = vpack.c.bf16 %v568, %v568
      %v574 = vsel %vm251, %v570, 0
      %v577 = vsel %vm255, %v571, 0
      %v580 = vsel %vm255, %v572, 0
      %582 = vmatprep.subr.bf16.mxu0 %v580
      %583 = vmatpush1.bf16.msra.mxu0 %v577
      %584 = vmatprep.subr.bf16.mxu0 0
      %585 = vmatpush1.bf16.msra.mxu0 0
      %586 = vmatprep.subr.bf16.mxu0 0
      %587 = vmatpush1.bf16.msra.mxu0 0
      %588 = vmatprep.subr.bf16.mxu0 0
      %589 = vmatpush1.bf16.msra.mxu0 0
      %590 = vmatprep.subr.bf16.mxu0 0
      %591 = vmatpush1.bf16.msra.mxu0 0
      %592 = vmatprep.subr.bf16.mxu0 0
      %593 = vmatpush1.bf16.msra.mxu0 0
      %594 = vmatprep.subr.bf16.mxu0 0
      %595 = vmatpush1.bf16.msra.mxu0 0
      %596 = vmatprep.subr.bf16.mxu0 0
      %597 = vmatpush1.bf16.msra.mxu0 0
      %598 = vmatprep.subr.bf16.mxu0 0
      %599 = vmatpush1.bf16.msra.mxu0 0
      %600 = vmatprep.subr.bf16.mxu0 0
      %601 = vmatpush1.bf16.msra.mxu0 0
      %602 = vmatprep.subr.bf16.mxu0 0
      %603 = vmatpush1.bf16.msra.mxu0 0
      %604 = vmatprep.subr.bf16.mxu0 0
      %605 = vmatpush1.bf16.msra.mxu0 0
      %606 = vmatprep.subr.bf16.mxu0 0
      %607 = vmatpush1.bf16.msra.mxu0 0
      %608 = vmatprep.subr.bf16.mxu0 0
      %609 = vmatpush1.bf16.msra.mxu0 0
      %610 = vmatprep.subr.bf16.mxu0 0
      %611 = vmatpush1.bf16.msra.mxu0 0
      %612 = vmatprep.subr.bf16.mxu0 0
      %613 = vmatpush1.bf16.msra.mxu0 0
      %614 = vmatprep.mubr.bf16.mxu0 0
      %615 = vmatmul.mubr.bf16.gmra.mrb[0].mxu0 %v574
      %v616 = vpop.f32.mrb[0].mxu0
      %v617 = vadd.f32 0.0, %v616
      %v618 = vpop.f32.mrb[0].mxu0
      %v619 = vadd.f32 0.0, %v618
      %v620 = vpop.f32.mrb[0].mxu0
      %v621 = vpop.f32.mrb[0].mxu0
      %622 = vdwg.mxu0
      %v623 = vsel %vm239, %v617, 0.0
      %v624 = vsel %vm240, %v619, 0.0
      %v625 = vadd.f32 %v560, %v623
      %v626 = vadd.f32 %v561, %v624
      %627 = vrot.lane.b32.xlu0 %v226, 113
      %v628 = vpop.permute.xlu0 %627
      %629 = vrot.lane.b32.xlu0 %v227, 113
      %v630 = vpop.permute.xlu0 %629
      %vm631 = vcmp.lt.s32.totalorder %v229, 113
      %v632 = vsel %vm631, %v628, %v630
      %v633 = vsel %vm631, %v630, %v628
      %s634 = scalar_lea.vmem %s1, 24
      %v635 = vld [vmem:[%s634] sm:$0x7]
      %v636 = vpack.c.bf16 %v632, %v632
      %v637 = vpack.c.bf16 %v633, %v633
      %v639 = vsel %vm251, %v635, 0
      %v642 = vsel %vm255, %v636, 0
      %v645 = vsel %vm255, %v637, 0
      %647 = vmatprep.subr.bf16.mxu0 %v645
      %648 = vmatpush1.bf16.msra.mxu0 %v642
      %649 = vmatprep.subr.bf16.mxu0 0
      %650 = vmatpush1.bf16.msra.mxu0 0
      %651 = vmatprep.subr.bf16.mxu0 0
      %652 = vmatpush1.bf16.msra.mxu0 0
      %653 = vmatprep.subr.bf16.mxu0 0
      %654 = vmatpush1.bf16.msra.mxu0 0
      %655 = vmatprep.subr.bf16.mxu0 0
      %656 = vmatpush1.bf16.msra.mxu0 0
      %657 = vmatprep.subr.bf16.mxu0 0
      %658 = vmatpush1.bf16.msra.mxu0 0
      %659 = vmatprep.subr.bf16.mxu0 0
      %660 = vmatpush1.bf16.msra.mxu0 0
      %661 = vmatprep.subr.bf16.mxu0 0
      %662 = vmatpush1.bf16.msra.mxu0 0
      %663 = vmatprep.subr.bf16.mxu0 0
      %664 = vmatpush1.bf16.msra.mxu0 0
      %665 = vmatprep.subr.bf16.mxu0 0
      %666 = vmatpush1.bf16.msra.mxu0 0
      %667 = vmatprep.subr.bf16.mxu0 0
      %668 = vmatpush1.bf16.msra.mxu0 0
      %669 = vmatprep.subr.bf16.mxu0 0
      %670 = vmatpush1.bf16.msra.mxu0 0
      %671 = vmatprep.subr.bf16.mxu0 0
      %672 = vmatpush1.bf16.msra.mxu0 0
      %673 = vmatprep.subr.bf16.mxu0 0
      %674 = vmatpush1.bf16.msra.mxu0 0
      %675 = vmatprep.subr.bf16.mxu0 0
      %676 = vmatpush1.bf16.msra.mxu0 0
      %677 = vmatprep.subr.bf16.mxu0 0
      %678 = vmatpush1.bf16.msra.mxu0 0
      %679 = vmatprep.mubr.bf16.mxu0 0
      %680 = vmatmul.mubr.bf16.gmra.mrb[0].mxu0 %v639
      %v681 = vpop.f32.mrb[0].mxu0
      %v682 = vadd.f32 0.0, %v681
      %v683 = vpop.f32.mrb[0].mxu0
      %v684 = vadd.f32 0.0, %v683
      %v685 = vpop.f32.mrb[0].mxu0
      %v686 = vpop.f32.mrb[0].mxu0
      %687 = vdwg.mxu0
      %vm688 = vmand %vm235, %vm237
      %vm689 = vmand %vm236, %vm238
      %v690 = vsel %vm688, %v682, 0.0
      %v691 = vsel %vm689, %v684, 0.0
      %v692 = vadd.f32 %v625, %v690
      %v693 = vadd.f32 %v626, %v691
      %694 = vrot.lane.b32.xlu0 %v226, 112
      %v695 = vpop.permute.xlu0 %694
      %696 = vrot.lane.b32.xlu0 %v227, 112
      %v697 = vpop.permute.xlu0 %696
      %vm698 = vcmp.lt.s32.totalorder %v229, 112
      %v699 = vsel %vm698, %v695, %v697
      %v700 = vsel %vm698, %v697, %v695
      %s701 = scalar_lea.vmem %s1, 28
      %v702 = vld [vmem:[%s701] sm:$0x7]
      %v703 = vpack.c.bf16 %v699, %v699
      %v704 = vpack.c.bf16 %v700, %v700
      %v706 = vsel %vm251, %v702, 0
      %v709 = vsel %vm255, %v703, 0
      %v712 = vsel %vm255, %v704, 0
      %714 = vmatprep.subr.bf16.mxu0 %v712
      %715 = vmatpush1.bf16.msra.mxu0 %v709
      %716 = vmatprep.subr.bf16.mxu0 0
      %717 = vmatpush1.bf16.msra.mxu0 0
      %718 = vmatprep.subr.bf16.mxu0 0
      %719 = vmatpush1.bf16.msra.mxu0 0
      %720 = vmatprep.subr.bf16.mxu0 0
      %721 = vmatpush1.bf16.msra.mxu0 0
      %722 = vmatprep.subr.bf16.mxu0 0
      %723 = vmatpush1.bf16.msra.mxu0 0
      %724 = vmatprep.subr.bf16.mxu0 0
      %725 = vmatpush1.bf16.msra.mxu0 0
      %726 = vmatprep.subr.bf16.mxu0 0
      %727 = vmatpush1.bf16.msra.mxu0 0
      %728 = vmatprep.subr.bf16.mxu0 0
      %729 = vmatpush1.bf16.msra.mxu0 0
      %730 = vmatprep.subr.bf16.mxu0 0
      %731 = vmatpush1.bf16.msra.mxu0 0
      %732 = vmatprep.subr.bf16.mxu0 0
      %733 = vmatpush1.bf16.msra.mxu0 0
      %734 = vmatprep.subr.bf16.mxu0 0
      %735 = vmatpush1.bf16.msra.mxu0 0
      %736 = vmatprep.subr.bf16.mxu0 0
      %737 = vmatpush1.bf16.msra.mxu0 0
      %738 = vmatprep.subr.bf16.mxu0 0
      %739 = vmatpush1.bf16.msra.mxu0 0
      %740 = vmatprep.subr.bf16.mxu0 0
      %741 = vmatpush1.bf16.msra.mxu0 0
      %742 = vmatprep.subr.bf16.mxu0 0
      %743 = vmatpush1.bf16.msra.mxu0 0
      %744 = vmatprep.subr.bf16.mxu0 0
      %745 = vmatpush1.bf16.msra.mxu0 0
      %746 = vmatprep.mubr.bf16.mxu0 0
      %747 = vmatmul.mubr.bf16.gmra.mrb[0].mxu0 %v706
      %v748 = vpop.f32.mrb[0].mxu0
      %v749 = vadd.f32 0.0, %v748
      %v750 = vpop.f32.mrb[0].mxu0
      %v751 = vadd.f32 0.0, %v750
      %v752 = vpop.f32.mrb[0].mxu0
      %v753 = vpop.f32.mrb[0].mxu0
      %754 = vdwg.mxu0
      %v755 = vsel %vm235, %v749, 0.0
      %v756 = vsel %vm236, %v751, 0.0
      %v757 = vadd.f32 %v692, %v755
      %v758 = vadd.f32 %v693, %v756
      %759 = vrot.lane.b32.xlu0 %v226, 111
      %v760 = vpop.permute.xlu0 %759
      %761 = vrot.lane.b32.xlu0 %v227, 111
      %v762 = vpop.permute.xlu0 %761
      %vm763 = vcmp.lt.s32.totalorder %v229, 111
      %v764 = vsel %vm763, %v760, %v762
      %v765 = vsel %vm763, %v762, %v760
      %s766 = scalar_lea.vmem %s1, 32
      %v767 = vld [vmem:[%s766] sm:$0x7]
      %v768 = vpack.c.bf16 %v764, %v764
      %v769 = vpack.c.bf16 %v765, %v765
      %v771 = vsel %vm251, %v767, 0
      %v774 = vsel %vm255, %v768, 0
      %v777 = vsel %vm255, %v769, 0
      %779 = vmatprep.subr.bf16.mxu0 %v777
      %780 = vmatpush1.bf16.msra.mxu0 %v774
      %781 = vmatprep.subr.bf16.mxu0 0
      %782 = vmatpush1.bf16.msra.mxu0 0
      %783 = vmatprep.subr.bf16.mxu0 0
      %784 = vmatpush1.bf16.msra.mxu0 0
      %785 = vmatprep.subr.bf16.mxu0 0
      %786 = vmatpush1.bf16.msra.mxu0 0
      %787 = vmatprep.subr.bf16.mxu0 0
      %788 = vmatpush1.bf16.msra.mxu0 0
      %789 = vmatprep.subr.bf16.mxu0 0
      %790 = vmatpush1.bf16.msra.mxu0 0
      %791 = vmatprep.subr.bf16.mxu0 0
      %792 = vmatpush1.bf16.msra.mxu0 0
      %793 = vmatprep.subr.bf16.mxu0 0
      %794 = vmatpush1.bf16.msra.mxu0 0
      %795 = vmatprep.subr.bf16.mxu0 0
      %796 = vmatpush1.bf16.msra.mxu0 0
      %797 = vmatprep.subr.bf16.mxu0 0
      %798 = vmatpush1.bf16.msra.mxu0 0
      %799 = vmatprep.subr.bf16.mxu0 0
      %800 = vmatpush1.bf16.msra.mxu0 0
      %801 = vmatprep.subr.bf16.mxu0 0
      %802 = vmatpush1.bf16.msra.mxu0 0
      %803 = vmatprep.subr.bf16.mxu0 0
      %804 = vmatpush1.bf16.msra.mxu0 0
      %805 = vmatprep.subr.bf16.mxu0 0
      %806 = vmatpush1.bf16.msra.mxu0 0
      %807 = vmatprep.subr.bf16.mxu0 0
      %808 = vmatpush1.bf16.msra.mxu0 0
      %809 = vmatprep.subr.bf16.mxu0 0
      %810 = vmatpush1.bf16.msra.mxu0 0
      %811 = vmatprep.mubr.bf16.mxu0 0
      %812 = vmatmul.mubr.bf16.gmra.mrb[0].mxu0 %v771
      %v813 = vpop.f32.mrb[0].mxu0
      %v814 = vadd.f32 0.0, %v813
      %v815 = vpop.f32.mrb[0].mxu0
      %v816 = vadd.f32 0.0, %v815
      %v817 = vpop.f32.mrb[0].mxu0
      %v818 = vpop.f32.mrb[0].mxu0
      %819 = vdwg.mxu0
      %vm820 = vmand %vm235, %vm239
      %vm821 = vmand %vm236, %vm240
      %v822 = vsel %vm820, %v814, 0.0
      %v823 = vsel %vm821, %v816, 0.0
      %v824 = vadd.f32 %v757, %v822
      %v825 = vadd.f32 %v758, %v823
      %v826 = vld [vmem:[%s2] sm:$0x3f]
      %828 = vset.pattern.permute.xlu0 0
      %829 = vperm.xlu0 %828, %v826
      %v830 = vpop.permute.xlu0 %829
      %v832 = vadd.f32 %v824, %v830
      %v833 = vadd.f32 %v825, %v830
      %v834 = vmax.f32 %v832, 0.0
      %v835 = vmax.f32 %v833, 0.0
      %v836 = vld [vmem:[%s3] sm:$0x1f]
      %v837 = vld [vmem:[%s4] sm:$0x1f]
      %839 = vset.pattern.permute.xlu0 0
      %840 = vperm.xlu0 %839, %v837
      %v841 = vpop.permute.xlu0 %840
      %vm843 = vcmask 48128
      %v845 = vsel %vm843, %v836, 0
      %vm847 = vcmask 1045504
      %v849 = vsel %vm847, %v834, 0
      %v852 = vsel %vm847, %v835, 0
      %854 = vmatprep.subr.mxu0 %v852
      %855 = vmatpush1.msra.mxu0 %v849
      %856 = vmatprep.subr.mxu0 0.0
      %857 = vmatpush1.msra.mxu0 0.0
      %858 = vmatprep.subr.mxu0 0.0
      %859 = vmatpush1.msra.mxu0 0.0
      %860 = vmatprep.subr.mxu0 0.0
      %861 = vmatpush1.msra.mxu0 0.0
      %862 = vmatprep.subr.mxu0 0.0
      %863 = vmatpush1.msra.mxu0 0.0
      %864 = vmatprep.subr.mxu0 0.0
      %865 = vmatpush1.msra.mxu0 0.0
      %866 = vmatprep.subr.mxu0 0.0
      %867 = vmatpush1.msra.mxu0 0.0
      %868 = vmatprep.subr.mxu0 0.0
      %869 = vmatpush1.msra.mxu0 0.0
      %870 = vmatprep.subr.mxu0 0.0
      %871 = vmatpush1.msra.mxu0 0.0
      %872 = vmatprep.subr.mxu0 0.0
      %873 = vmatpush1.msra.mxu0 0.0
      %874 = vmatprep.subr.mxu0 0.0
      %875 = vmatpush1.msra.mxu0 0.0
      %876 = vmatprep.subr.mxu0 0.0
      %877 = vmatpush1.msra.mxu0 0.0
      %878 = vmatprep.subr.mxu0 0.0
      %879 = vmatpush1.msra.mxu0 0.0
      %880 = vmatprep.subr.mxu0 0.0
      %881 = vmatpush1.msra.mxu0 0.0
      %882 = vmatprep.subr.mxu0 0.0
      %883 = vmatpush1.msra.mxu0 0.0
      %884 = vmatprep.subr.mxu0 0.0
      %885 = vmatpush1.msra.mxu0 0.0
      %886 = vmatprep.subr.mxu0 0.0
      %887 = vmatpush1.msra.mxu0 0.0
      %888 = vmatprep.subr.mxu0 0.0
      %889 = vmatpush1.msra.mxu0 0.0
      %890 = vmatprep.subr.mxu0 0.0
      %891 = vmatpush1.msra.mxu0 0.0
      %892 = vmatprep.subr.mxu0 0.0
      %893 = vmatpush1.msra.mxu0 0.0
      %894 = vmatprep.subr.mxu0 0.0
      %895 = vmatpush1.msra.mxu0 0.0
      %896 = vmatprep.subr.mxu0 0.0
      %897 = vmatpush1.msra.mxu0 0.0
      %898 = vmatprep.subr.mxu0 0.0
      %899 = vmatpush1.msra.mxu0 0.0
      %900 = vmatprep.subr.mxu0 0.0
      %901 = vmatpush1.msra.mxu0 0.0
      %902 = vmatprep.subr.mxu0 0.0
      %903 = vmatpush1.msra.mxu0 0.0
      %904 = vmatprep.subr.mxu0 0.0
      %905 = vmatpush1.msra.mxu0 0.0
      %906 = vmatprep.subr.mxu0 0.0
      %907 = vmatpush1.msra.mxu0 0.0
      %908 = vmatprep.subr.mxu0 0.0
      %909 = vmatpush1.msra.mxu0 0.0
      %910 = vmatprep.subr.mxu0 0.0
      %911 = vmatpush1.msra.mxu0 0.0
      %912 = vmatprep.subr.mxu0 0.0
      %913 = vmatpush1.msra.mxu0 0.0
      %914 = vmatprep.subr.mxu0 0.0
      %915 = vmatpush1.msra.mxu0 0.0
      %916 = vmatprep.subr.mxu0 0.0
      %917 = vmatpush1.msra.mxu0 0.0
      %918 = vmatprep.mubr.f32.mxu0 0.0
      %919 = vmatmul.mubr.f32.gmra.mrb[0].mxu0 %v845
      %v920 = vpop.f32.mrb[0].mxu0
      %v921 = vadd.f32 %v841, %v920
      %v922 = vpop.f32.mrb[0].mxu0
      %v923 = vadd.f32 %v841, %v922
      %924 = vdwg.mxu0
      %925 = vst [vmem:[%s224] sm:$0x7] %v921
      %926 = vst [vmem:[%s224 + $0x8] sm:$0x7] %v923
      %v929 = vcombine.low %v921, %v923
      %v931 = vunpack.c.l.s4 1966171168
      %v932 = vunpack.c.0.s8 %v931
      %v933 = vlaneseq
      %v934 = vshrl.u32 %v933, 7
      %v935 = vsub.s32 %v932, %v934
      %v936 = vrot.slane %v929, %v935
      %v937 = vcombine.high %v936, %v936
      %v939 = vunpack.c.l.s4 1966171168
      %v940 = vunpack.c.0.s8 %v939
      %v941 = vlaneseq
      %v942 = vshrl.u32 %v941, 7
      %v943 = vsub.s32 %v940, %v942
      %v944 = vrot.slane %v937, %v943
      %v945 = vcombine.high %v944, %v944
      %v947 = vlaneseq
      %vm948 = vcmp.ge.s32.totalorder %v947, 0
      %vm949 = vcmp.lt.s32.totalorder %v947, 256
      %vm950 = vmand %vm948, %vm949
      %s951 = scalar_lea.vmem %s224, 3
      %952 = vst.msk [vmem:[%s951] ss:$8 sm:$0x3] %vm950, %v945
      %953 = vst.msk [vmem:[%s951] ss:$8 sm:$0x0] %vm950, %v945
      %v954 = vand.u32 2147483647, %v921
      %vm955 = vcmp.le.f32.partialorder %v954, 0.7853982
      %vm956 = vcmp.lt.s32.totalorder %v921, 0
      %v957 = vand.u32 %v921, 2139095040
      %v958 = vshrl.u32 %v957, 23
      %v959 = vsub.s32 %v958, 127
      %v960 = vand.u32 2147483647, %v921
      %v961 = vand.u32 %v960, 8388607
      %v962 = vor.u32 %v961, 8388608
      %v963 = vsub.s32 0, %v962
      %v964 = vadd.s32 %v959, 1
      %vm965 = vcmp.gt.s32.totalorder %v964, 0
      %v966 = vsel %vm965, %v964, 0
      %v967 = vshrl.u32 %v966, 5
      %v968 = vand.u32 %v966, 31
      %v969 = vsub.s32 32, %v968
      %v970 = vshrl.u32 683565275, %v969
      %v971 = vshll.u32 683565275, %v968
      %v972 = vshrl.u32 2475754826, %v969
      %v973 = vor.u32 %v971, %v972
      %v974 = vshll.u32 2475754826, %v968
      %v975 = vshrl.u32 2131351028, %v969
      %v976 = vor.u32 %v974, %v975
      %v977 = vshll.u32 2131351028, %v968
      %v978 = vshrl.u32 2102212464, %v969
      %v979 = vor.u32 %v977, %v978
      %v980 = vshll.u32 2102212464, %v968
      %v981 = vshrl.u32 920167782, %v969
      %v982 = vor.u32 %v980, %v981
      %v983 = vshll.u32 920167782, %v968
      %v984 = vshrl.u32 1326507024, %v969
      %v985 = vor.u32 %v983, %v984
      %vm986 = vcmp.lt.s32.totalorder %v967, 1
      %vm987 = vcmp.lt.s32.totalorder %v967, 2
      %vm988 = vcmp.lt.s32.totalorder %v967, 3
      %vm989 = vcmp.lt.s32.totalorder %v967, 4
      %v990 = vsel %vm986, %v970, %v973
      %v991 = vsel %vm989, %v979, 2102212464
      %v992 = vsel %vm988, %v976, %v991
      %v993 = vsel %vm987, %v990, %v992
      %v994 = vsel %vm986, %v973, %v976
      %v995 = vsel %vm989, %v982, 920167782
      %v996 = vsel %vm988, %v979, %v995
      %v997 = vsel %vm987, %v994, %v996
      %v998 = vsel %vm986, %v976, %v979
      %v999 = vsel %vm989, %v985, 1326507024
      %v1000 = vsel %vm988, %v982, %v999
      %v1001 = vsel %vm987, %v998, %v1000
      %v1002 = vshll.u32 %v962, 8
      %v1003 = vmul.u32.u64.compose %v1002, %v1001
      %v1004 = vextract.low.u32 %v1003
      %v1005 = vextract.high.u32 %v1003
      %v1006 = vmul.u32.u64.compose %v1002, %v997
      %v1007 = vextract.low.u32 %v1006
      %v1008 = vextract.high.u32 %v1006
      %v1009 = vmul.u32 %v1002, %v993
      %v1010 = vadd.s32 %v1005, %v1007
      %vm1011 = vc.u32 %v1005, %v1007
      %v1012 = vadd.s32 %v1008, 1
      %v1013 = vsel %vm1011, %v1012, %v1008
      %v1014 = vadd.s32 %v1009, %v1013
      %v1015 = vadd.s32 %v1014, 536870912
      %v1016 = vshrl.u32 %v1015, 30
      %v1017 = vshll.u32 %v1016, 30
      %v1018 = vsub.s32 %v1014, %v1017
      %vm1019 = vcmp.lt.s32.totalorder %v1018, 0
      %v1020 = vsub.s32 0, %v1018
      %v1021 = vsel %vm1019, %v1020, %v1018
      %v1022 = vclz %v1021
      %v1023 = vsub.s32 %v1022, 2
      %vm1024 = vcmp.gt.s32.totalorder 0, %v1023
      %v1025 = vsel %vm1024, 0, %v1023
      %v1026 = vsub.s32 32, %v1025
      %v1027 = vshll.u32 %v1018, %v1025
      %v1028 = vshrl.u32 %v1010, %v1026
      %v1029 = vor.u32 %v1027, %v1028
      %v1030 = vsub.s32 4294967266, %v1025
      %v1031 = vadd.s32 %v1030, 127
      %v1032 = vshll.u32 %v1031, 23
      %v1033 = vor.u32 4788187, %v1032
      %v1034 = vand.u32 2147483647, %v1033
      %v1036 = vcvt.s32.f32 %v1029
      %v1037 = vmul.f32 %v1036, %v1034
      %v1038 = vxor.u32 %v1037, 2147483648
      %v1039 = vsel %vm956, %v1038, %v1037
      %v1040 = vsub.s32 4, %v1016
      %v1041 = vsel %vm956, %v1040, %v1016
      %v1042 = vsel %vm955, %v921, %v1039
      %v1043 = vsel %vm955, 0, %v1041
      %v1044 = vcosq.f32.pop %v1042
      %v1045 = vsinq.f32.pop %v1042
      %vm1046 = vweird.f32 %v921
      %v1047 = vand.u32 %v1043, 3
      %vm1048 = vcmp.lt.s32.totalorder %v1047, 2
      %vm1049 = vcmp.eq.s32.totalorder %v1047, 0
      %v1050 = vxor.u32 %v1045, 2147483648
      %v1051 = vsel %vm1049, %v1044, %v1050
      %vm1052 = vcmp.eq.s32.totalorder %v1047, 2
      %v1053 = vxor.u32 %v1044, 2147483648
      %v1054 = vsel %vm1052, %v1053, %v1045
      %v1055 = vsel %vm1048, %v1051, %v1054
      %v1056 = vsel %vm1046, nan, %v1055
      %v1057 = vand.u32 2147483647, %v923
      %vm1058 = vcmp.le.f32.partialorder %v1057, 0.7853982
      %vm1059 = vcmp.lt.s32.totalorder %v923, 0
      %v1060 = vand.u32 %v923, 2139095040
      %v1061 = vshrl.u32 %v1060, 23
      %v1062 = vsub.s32 %v1061, 127
      %v1063 = vand.u32 2147483647, %v923
      %v1064 = vand.u32 %v1063, 8388607
      %v1065 = vor.u32 %v1064, 8388608
      %v1066 = vsub.s32 0, %v1065
      %v1067 = vadd.s32 %v1062, 1
      %vm1068 = vcmp.gt.s32.totalorder %v1067, 0
      %v1069 = vsel %vm1068, %v1067, 0
      %v1070 = vshrl.u32 %v1069, 5
      %v1071 = vand.u32 %v1069, 31
      %v1072 = vsub.s32 32, %v1071
      %v1073 = vshrl.u32 683565275, %v1072
      %v1074 = vshll.u32 683565275, %v1071
      %v1075 = vshrl.u32 2475754826, %v1072
      %v1076 = vor.u32 %v1074, %v1075
      %v1077 = vshll.u32 2475754826, %v1071
      %v1078 = vshrl.u32 2131351028, %v1072
      %v1079 = vor.u32 %v1077, %v1078
      %v1080 = vshll.u32 2131351028, %v1071
      %v1081 = vshrl.u32 2102212464, %v1072
      %v1082 = vor.u32 %v1080, %v1081
      %v1083 = vshll.u32 2102212464, %v1071
      %v1084 = vshrl.u32 920167782, %v1072
      %v1085 = vor.u32 %v1083, %v1084
      %v1086 = vshll.u32 920167782, %v1071
      %v1087 = vshrl.u32 1326507024, %v1072
      %v1088 = vor.u32 %v1086, %v1087
      %vm1089 = vcmp.lt.s32.totalorder %v1070, 1
      %vm1090 = vcmp.lt.s32.totalorder %v1070, 2
      %vm1091 = vcmp.lt.s32.totalorder %v1070, 3
      %vm1092 = vcmp.lt.s32.totalorder %v1070, 4
      %v1093 = vsel %vm1089, %v1073, %v1076
      %v1094 = vsel %vm1092, %v1082, 2102212464
      %v1095 = vsel %vm1091, %v1079, %v1094
      %v1096 = vsel %vm1090, %v1093, %v1095
      %v1097 = vsel %vm1089, %v1076, %v1079
      %v1098 = vsel %vm1092, %v1085, 920167782
      %v1099 = vsel %vm1091, %v1082, %v1098
      %v1100 = vsel %vm1090, %v1097, %v1099
      %v1101 = vsel %vm1089, %v1079, %v1082
      %v1102 = vsel %vm1092, %v1088, 1326507024
      %v1103 = vsel %vm1091, %v1085, %v1102
      %v1104 = vsel %vm1090, %v1101, %v1103
      %v1105 = vshll.u32 %v1065, 8
      %v1106 = vmul.u32.u64.compose %v1105, %v1104
      %v1107 = vextract.low.u32 %v1106
      %v1108 = vextract.high.u32 %v1106
      %v1109 = vmul.u32.u64.compose %v1105, %v1100
      %v1110 = vextract.low.u32 %v1109
      %v1111 = vextract.high.u32 %v1109
      %v1112 = vmul.u32 %v1105, %v1096
      %v1113 = vadd.s32 %v1108, %v1110
      %vm1114 = vc.u32 %v1108, %v1110
      %v1115 = vadd.s32 %v1111, 1
      %v1116 = vsel %vm1114, %v1115, %v1111
      %v1117 = vadd.s32 %v1112, %v1116
      %v1118 = vadd.s32 %v1117, 536870912
      %v1119 = vshrl.u32 %v1118, 30
      %v1120 = vshll.u32 %v1119, 30
      %v1121 = vsub.s32 %v1117, %v1120
      %vm1122 = vcmp.lt.s32.totalorder %v1121, 0
      %v1123 = vsub.s32 0, %v1121
      %v1124 = vsel %vm1122, %v1123, %v1121
      %v1125 = vclz %v1124
      %v1126 = vsub.s32 %v1125, 2
      %vm1127 = vcmp.gt.s32.totalorder 0, %v1126
      %v1128 = vsel %vm1127, 0, %v1126
      %v1129 = vsub.s32 32, %v1128
      %v1130 = vshll.u32 %v1121, %v1128
      %v1131 = vshrl.u32 %v1113, %v1129
      %v1132 = vor.u32 %v1130, %v1131
      %v1133 = vsub.s32 4294967266, %v1128
      %v1134 = vadd.s32 %v1133, 127
      %v1135 = vshll.u32 %v1134, 23
      %v1136 = vor.u32 4788187, %v1135
      %v1137 = vand.u32 2147483647, %v1136
      %v1139 = vcvt.s32.f32 %v1132
      %v1140 = vmul.f32 %v1139, %v1137
      %v1141 = vxor.u32 %v1140, 2147483648
      %v1142 = vsel %vm1059, %v1141, %v1140
      %v1143 = vsub.s32 4, %v1119
      %v1144 = vsel %vm1059, %v1143, %v1119
      %v1145 = vsel %vm1058, %v923, %v1142
      %v1146 = vsel %vm1058, 0, %v1144
      %v1147 = vcosq.f32.pop %v1145
      %v1148 = vsinq.f32.pop %v1145
      %vm1149 = vweird.f32 %v923
      %v1150 = vand.u32 %v1146, 3
      %vm1151 = vcmp.lt.s32.totalorder %v1150, 2
      %vm1152 = vcmp.eq.s32.totalorder %v1150, 0
      %v1153 = vxor.u32 %v1148, 2147483648
      %v1154 = vsel %vm1152, %v1147, %v1153
      %vm1155 = vcmp.eq.s32.totalorder %v1150, 2
      %v1156 = vxor.u32 %v1147, 2147483648
      %v1157 = vsel %vm1155, %v1156, %v1148
      %v1158 = vsel %vm1151, %v1154, %v1157
      %v1159 = vsel %vm1149, nan, %v1158
      %v1162 = vcombine.high %v1056, %v1159
      %v1164 = vunpack.c.l.s4 1966171168
      %v1165 = vunpack.c.0.s8 %v1164
      %v1166 = vlaneseq
      %v1167 = vshrl.u32 %v1166, 7
      %v1168 = vsub.s32 %v1165, %v1167
      %v1169 = vrot.slane %v1162, %v1168
      %v1171 = vunpack.c.l.s4 1966171168
      %v1172 = vunpack.c.0.s8 %v1171
      %v1173 = vlaneseq
      %v1174 = vshrl.u32 %v1173, 7
      %v1175 = vsub.s32 %v1172, %v1174
      %v1176 = vrot.slane %v1169, %v1175
      %s1178 = scalar_lea.vmem %s224, 4
      %1179 = vst.msk [vmem:[%s1178] ss:$8 sm:$0x3] %vm950, %v1176
      %1180 = vst.msk [vmem:[%s1178] ss:$8 sm:$0x0] %vm950, %v1176
      %v1181 = vand.u32 2147483647, %v921
      %vm1182 = vcmp.le.f32.partialorder %v1181, 0.7853982
      %vm1183 = vcmp.lt.s32.totalorder %v921, 0
      %v1184 = vand.u32 %v921, 2139095040
      %v1185 = vshrl.u32 %v1184, 23
      %v1186 = vsub.s32 %v1185, 127
      %v1187 = vand.u32 2147483647, %v921
      %v1188 = vand.u32 %v1187, 8388607
      %v1189 = vor.u32 %v1188, 8388608
      %v1190 = vsub.s32 0, %v1189
      %v1191 = vadd.s32 %v1186, 1
      %vm1192 = vcmp.gt.s32.totalorder %v1191, 0
      %v1193 = vsel %vm1192, %v1191, 0
      %v1194 = vshrl.u32 %v1193, 5
      %v1195 = vand.u32 %v1193, 31
      %v1196 = vsub.s32 32, %v1195
      %v1197 = vshrl.u32 683565275, %v1196
      %v1198 = vshll.u32 683565275, %v1195
      %v1199 = vshrl.u32 2475754826, %v1196
      %v1200 = vor.u32 %v1198, %v1199
      %v1201 = vshll.u32 2475754826, %v1195
      %v1202 = vshrl.u32 2131351028, %v1196
      %v1203 = vor.u32 %v1201, %v1202
      %v1204 = vshll.u32 2131351028, %v1195
      %v1205 = vshrl.u32 2102212464, %v1196
      %v1206 = vor.u32 %v1204, %v1205
      %v1207 = vshll.u32 2102212464, %v1195
      %v1208 = vshrl.u32 920167782, %v1196
      %v1209 = vor.u32 %v1207, %v1208
      %v1210 = vshll.u32 920167782, %v1195
      %v1211 = vshrl.u32 1326507024, %v1196
      %v1212 = vor.u32 %v1210, %v1211
      %vm1213 = vcmp.lt.s32.totalorder %v1194, 1
      %vm1214 = vcmp.lt.s32.totalorder %v1194, 2
      %vm1215 = vcmp.lt.s32.totalorder %v1194, 3
      %vm1216 = vcmp.lt.s32.totalorder %v1194, 4
      %v1217 = vsel %vm1213, %v1197, %v1200
      %v1218 = vsel %vm1216, %v1206, 2102212464
      %v1219 = vsel %vm1215, %v1203, %v1218
      %v1220 = vsel %vm1214, %v1217, %v1219
      %v1221 = vsel %vm1213, %v1200, %v1203
      %v1222 = vsel %vm1216, %v1209, 920167782
      %v1223 = vsel %vm1215, %v1206, %v1222
      %v1224 = vsel %vm1214, %v1221, %v1223
      %v1225 = vsel %vm1213, %v1203, %v1206
      %v1226 = vsel %vm1216, %v1212, 1326507024
      %v1227 = vsel %vm1215, %v1209, %v1226
      %v1228 = vsel %vm1214, %v1225, %v1227
      %v1229 = vshll.u32 %v1189, 8
      %v1230 = vmul.u32.u64.compose %v1229, %v1228
      %v1231 = vextract.low.u32 %v1230
      %v1232 = vextract.high.u32 %v1230
      %v1233 = vmul.u32.u64.compose %v1229, %v1224
      %v1234 = vextract.low.u32 %v1233
      %v1235 = vextract.high.u32 %v1233
      %v1236 = vmul.u32 %v1229, %v1220
      %v1237 = vadd.s32 %v1232, %v1234
      %vm1238 = vc.u32 %v1232, %v1234
      %v1239 = vadd.s32 %v1235, 1
      %v1240 = vsel %vm1238, %v1239, %v1235
      %v1241 = vadd.s32 %v1236, %v1240
      %v1242 = vadd.s32 %v1241, 536870912
      %v1243 = vshrl.u32 %v1242, 30
      %v1244 = vshll.u32 %v1243, 30
      %v1245 = vsub.s32 %v1241, %v1244
      %vm1246 = vcmp.lt.s32.totalorder %v1245, 0
      %v1247 = vsub.s32 0, %v1245
      %v1248 = vsel %vm1246, %v1247, %v1245
      %v1249 = vclz %v1248
      %v1250 = vsub.s32 %v1249, 2
      %vm1251 = vcmp.gt.s32.totalorder 0, %v1250
      %v1252 = vsel %vm1251, 0, %v1250
      %v1253 = vsub.s32 32, %v1252
      %v1254 = vshll.u32 %v1245, %v1252
      %v1255 = vshrl.u32 %v1237, %v1253
      %v1256 = vor.u32 %v1254, %v1255
      %v1257 = vsub.s32 4294967266, %v1252
      %v1258 = vadd.s32 %v1257, 127
      %v1259 = vshll.u32 %v1258, 23
      %v1260 = vor.u32 4788187, %v1259
      %v1261 = vand.u32 2147483647, %v1260
      %v1263 = vcvt.s32.f32 %v1256
      %v1264 = vmul.f32 %v1263, %v1261
      %v1265 = vxor.u32 %v1264, 2147483648
      %v1266 = vsel %vm1183, %v1265, %v1264
      %v1267 = vsub.s32 4, %v1243
      %v1268 = vsel %vm1183, %v1267, %v1243
      %v1269 = vsel %vm1182, %v921, %v1266
      %v1270 = vsel %vm1182, 0, %v1268
      %v1271 = vcosq.f32.pop %v1269
      %v1272 = vsinq.f32.pop %v1269
      %vm1273 = vweird.f32 %v921
      %v1274 = vadd.s32 %v1270, 3
      %v1275 = vand.u32 %v1274, 3
      %vm1276 = vcmp.lt.s32.totalorder %v1275, 2
      %vm1277 = vcmp.eq.s32.totalorder %v1275, 0
      %v1278 = vxor.u32 %v1272, 2147483648
      %v1279 = vsel %vm1277, %v1271, %v1278
      %vm1280 = vcmp.eq.s32.totalorder %v1275, 2
      %v1281 = vxor.u32 %v1271, 2147483648
      %v1282 = vsel %vm1280, %v1281, %v1272
      %v1283 = vsel %vm1276, %v1279, %v1282
      %v1284 = vsel %vm1273, nan, %v1283
      %v1285 = vand.u32 2147483647, %v923
      %vm1286 = vcmp.le.f32.partialorder %v1285, 0.7853982
      %vm1287 = vcmp.lt.s32.totalorder %v923, 0
      %v1288 = vand.u32 %v923, 2139095040
      %v1289 = vshrl.u32 %v1288, 23
      %v1290 = vsub.s32 %v1289, 127
      %v1291 = vand.u32 2147483647, %v923
      %v1292 = vand.u32 %v1291, 8388607
      %v1293 = vor.u32 %v1292, 8388608
      %v1294 = vsub.s32 0, %v1293
      %v1295 = vadd.s32 %v1290, 1
      %vm1296 = vcmp.gt.s32.totalorder %v1295, 0
      %v1297 = vsel %vm1296, %v1295, 0
      %v1298 = vshrl.u32 %v1297, 5
      %v1299 = vand.u32 %v1297, 31
      %v1300 = vsub.s32 32, %v1299
      %v1301 = vshrl.u32 683565275, %v1300
      %v1302 = vshll.u32 683565275, %v1299
      %v1303 = vshrl.u32 2475754826, %v1300
      %v1304 = vor.u32 %v1302, %v1303
      %v1305 = vshll.u32 2475754826, %v1299
      %v1306 = vshrl.u32 2131351028, %v1300
      %v1307 = vor.u32 %v1305, %v1306
      %v1308 = vshll.u32 2131351028, %v1299
      %v1309 = vshrl.u32 2102212464, %v1300
      %v1310 = vor.u32 %v1308, %v1309
      %v1311 = vshll.u32 2102212464, %v1299
      %v1312 = vshrl.u32 920167782, %v1300
      %v1313 = vor.u32 %v1311, %v1312
      %v1314 = vshll.u32 920167782, %v1299
      %v1315 = vshrl.u32 1326507024, %v1300
      %v1316 = vor.u32 %v1314, %v1315
      %vm1317 = vcmp.lt.s32.totalorder %v1298, 1
      %vm1318 = vcmp.lt.s32.totalorder %v1298, 2
      %vm1319 = vcmp.lt.s32.totalorder %v1298, 3
      %vm1320 = vcmp.lt.s32.totalorder %v1298, 4
      %v1321 = vsel %vm1317, %v1301, %v1304
      %v1322 = vsel %vm1320, %v1310, 2102212464
      %v1323 = vsel %vm1319, %v1307, %v1322
      %v1324 = vsel %vm1318, %v1321, %v1323
      %v1325 = vsel %vm1317, %v1304, %v1307
      %v1326 = vsel %vm1320, %v1313, 920167782
      %v1327 = vsel %vm1319, %v1310, %v1326
      %v1328 = vsel %vm1318, %v1325, %v1327
      %v1329 = vsel %vm1317, %v1307, %v1310
      %v1330 = vsel %vm1320, %v1316, 1326507024
      %v1331 = vsel %vm1319, %v1313, %v1330
      %v1332 = vsel %vm1318, %v1329, %v1331
      %v1333 = vshll.u32 %v1293, 8
      %v1334 = vmul.u32.u64.compose %v1333, %v1332
      %v1335 = vextract.low.u32 %v1334
      %v1336 = vextract.high.u32 %v1334
      %v1337 = vmul.u32.u64.compose %v1333, %v1328
      %v1338 = vextract.low.u32 %v1337
      %v1339 = vextract.high.u32 %v1337
      %v1340 = vmul.u32 %v1333, %v1324
      %v1341 = vadd.s32 %v1336, %v1338
      %vm1342 = vc.u32 %v1336, %v1338
      %v1343 = vadd.s32 %v1339, 1
      %v1344 = vsel %vm1342, %v1343, %v1339
      %v1345 = vadd.s32 %v1340, %v1344
      %v1346 = vadd.s32 %v1345, 536870912
      %v1347 = vshrl.u32 %v1346, 30
      %v1348 = vshll.u32 %v1347, 30
      %v1349 = vsub.s32 %v1345, %v1348
      %vm1350 = vcmp.lt.s32.totalorder %v1349, 0
      %v1351 = vsub.s32 0, %v1349
      %v1352 = vsel %vm1350, %v1351, %v1349
      %v1353 = vclz %v1352
      %v1354 = vsub.s32 %v1353, 2
      %vm1355 = vcmp.gt.s32.totalorder 0, %v1354
      %v1356 = vsel %vm1355, 0, %v1354
      %v1357 = vsub.s32 32, %v1356
      %v1358 = vshll.u32 %v1349, %v1356
      %v1359 = vshrl.u32 %v1341, %v1357
      %v1360 = vor.u32 %v1358, %v1359
      %v1361 = vsub.s32 4294967266, %v1356
      %v1362 = vadd.s32 %v1361, 127
      %v1363 = vshll.u32 %v1362, 23
      %v1364 = vor.u32 4788187, %v1363
      %v1365 = vand.u32 2147483647, %v1364
      %v1367 = vcvt.s32.f32 %v1360
      %v1368 = vmul.f32 %v1367, %v1365
      %v1369 = vxor.u32 %v1368, 2147483648
      %v1370 = vsel %vm1287, %v1369, %v1368
      %v1371 = vsub.s32 4, %v1347
      %v1372 = vsel %vm1287, %v1371, %v1347
      %v1373 = vsel %vm1286, %v923, %v1370
      %v1374 = vsel %vm1286, 0, %v1372
      %v1375 = vcosq.f32.pop %v1373
      %v1376 = vsinq.f32.pop %v1373
      %vm1377 = vweird.f32 %v923
      %v1378 = vadd.s32 %v1374, 3
      %v1379 = vand.u32 %v1378, 3
      %vm1380 = vcmp.lt.s32.totalorder %v1379, 2
      %vm1381 = vcmp.eq.s32.totalorder %v1379, 0
      %v1382 = vxor.u32 %v1376, 2147483648
      %v1383 = vsel %vm1381, %v1375, %v1382
      %vm1384 = vcmp.eq.s32.totalorder %v1379, 2
      %v1385 = vxor.u32 %v1375, 2147483648
      %v1386 = vsel %vm1384, %v1385, %v1376
      %v1387 = vsel %vm1380, %v1383, %v1386
      %v1388 = vsel %vm1377, nan, %v1387
      %v1391 = vcombine.high %v1284, %v1388
      %v1393 = vunpack.c.l.s4 1966171168
      %v1394 = vunpack.c.0.s8 %v1393
      %v1395 = vlaneseq
      %v1396 = vshrl.u32 %v1395, 7
      %v1397 = vsub.s32 %v1394, %v1396
      %v1398 = vrot.slane %v1391, %v1397
      %v1400 = vunpack.c.l.s4 1966171168
      %v1401 = vunpack.c.0.s8 %v1400
      %v1402 = vlaneseq
      %v1403 = vshrl.u32 %v1402, 7
      %v1404 = vsub.s32 %v1401, %v1403
      %v1405 = vrot.slane %v1398, %v1404
      %s1407 = scalar_lea.vmem %s224, 5
      %1408 = vst.msk [vmem:[%s1407] ss:$8 sm:$0x3] %vm950, %v1405
      %1409 = vst.msk [vmem:[%s1407] ss:$8 sm:$0x0] %vm950, %v1405
      %p1410 = scmp.lt.s32.totalorder %s16, 1
      %s1411 = scalar_select %p1410, %s16, 1
      %s1412 = smul.addr %s1411, 2
      %s1413 = smul.addr %s1412, 8
      %s1414 = scalar_lea.vmem %s5, %s1413
      // Predicated region
      $region41: #{angle_distance_head.1} parent=39 // pred_check
        %p1415 = pneg %p144
      $region42: #{angle_distance_head.1} parent=39 // pred_check_branch
        %1417 = sbr.rel (%p1415) target = $region44
      $region43: #{angle_distance_head.1} parent=39 // pred_region
        _
      $region44: #{angle_distance_head.1} parent=39 // pred_fallthru
        _
    $region40: #{angle_distance_head.1} parent=5 // pred_fallthru
      _
    %p1418 = scmp.le.s32.totalorder 2, %s11
    // Predicated region
    $region45: #{angle_distance_head.1} parent=5 // pred_check
      %p1419 = pneg %p1418
    $region46: #{angle_distance_head.1} parent=5 // pred_check_branch
      %1421 = sbr.rel (%p1419) target = $region48
    $region47: #{angle_distance_head.1} parent=5 // pred_region
      %s1422 = ssub.s32 %s11, 2
      // Predicated region
      $region49: #{angle_distance_head.1} parent=47 // pred_check
        %p1423 = pneg %p150
      $region50: #{angle_distance_head.1} parent=47 // pred_check_branch
        %1425 = sbr.rel (%p1423) target = $region52
      $region51: #{angle_distance_head.1} parent=47 // pred_region
        %p1426 = scmp.lt.s32.totalorder %s17, 1
        %s1427 = scalar_select %p1426, %s17, 1
        %s1428 = smul.addr %s1427, 2
        %s1429 = smul.addr %s1428, 8
        %s1430 = scalar_lea.vmem %s5, %s1429
      $region52: #{angle_distance_head.1} parent=47 // pred_fallthru
        _
    $region48: #{angle_distance_head.1} parent=5 // pred_fallthru
      _
  $region6: #{angle_distance_head.1} parent=0 // loop_footer
    %s15 = sadd.s32 1, %s11
  $region7: #{angle_distance_head.1} parent=0 // loop_footer_branch
    %10 = sbr.rel target = $region3
  $region8: #{angle_distance_head.1} parent=0 // loop_exit
    _

</llo_original>
